<compile_context>
chip_gen: v7x
topology: tpu7x:2x2x1
jax: 0.10.0
libtpu: 0.0.40
codegen_flags: <defaults>
</compile_context>

<pallas_src>
import jax
import jax.numpy as jnp
from jax.experimental import pallas as pl
from jax.experimental.pallas import tpu as pltpu

NOISE_DIM = 32
HIDDEN = 500
HIDDEN_P = 512            # lane-aligned (zero-padded) hidden width
OUT_DIM = 28 * 28         # 784
OUT_P = 896               # 7 * 128, lane-aligned padded output width
BATCH = 8
BN_EPS = 1e-6             # module explicitly sets eps=1e-06


def _softplus(z):
    # PyTorch Softplus (beta=1, threshold=20): x if x > 20 else log(1 + exp(x)).
    # exp overflow in the discarded branch is inf (not NaN), so no extra clamp needed.
    return jnp.where(z > 20.0, z, jnp.log1p(jnp.exp(z)))


def _batchnorm(h):
    # BatchNorm1d, training-mode batch stats, affine=False, biased variance.
    mu = jnp.mean(h, axis=0, keepdims=True)
    var = jnp.mean((h - mu) * (h - mu), axis=0, keepdims=True)
    return (h - mu) * jax.lax.rsqrt(var + BN_EPS)


def generator_kernel(x_ref, w1_ref, w2_ref, w3_ref, b3_ref, out_ref):
    # Layer 1: Linear(no bias) -> BN -> Softplus
    h = jnp.dot(x_ref[...], w1_ref[...], preferred_element_type=jnp.float32)
    h = _softplus(_batchnorm(h))
    # NOTE: padded hidden columns (500..511) become softplus(0)=ln2 here; correctness
    # relies on w2/w3 rows 500:512 being exactly zero (guaranteed by prepare_params).

    # Layer 2: Linear(no bias) -> BN -> Softplus
    h = jnp.dot(h.astype(jnp.bfloat16), w2_ref[...],
                preferred_element_type=jnp.float32)
    h = _softplus(_batchnorm(h))

    # Layer 3: weight-normalized Linear (scale pre-folded into w3) + bias -> Softplus
    y = jnp.dot(h.astype(jnp.bfloat16), w3_ref[...],
                preferred_element_type=jnp.float32)
    out_ref[...] = _softplus(y + b3_ref[...])


def generator_forward(x, w1, w2, w3, b3):
    batch = x.shape[0]
    out_padded = pl.pallas_call(
        generator_kernel,
        out_shape=jax.ShapeDtypeStruct((batch, OUT_P), jnp.float32),
        grid_spec=pltpu.PrefetchScalarGridSpec(
            num_scalar_prefetch=0,
            grid=(1,),                                              # single step
            in_specs=[
                pl.BlockSpec((batch, NOISE_DIM), lambda i: (0, 0)),   # x
                pl.BlockSpec((NOISE_DIM, HIDDEN_P), lambda i: (0, 0)),  # w1
                pl.BlockSpec((HIDDEN_P, HIDDEN_P), lambda i: (0, 0)),   # w2
                pl.BlockSpec((HIDDEN_P, OUT_P), lambda i: (0, 0)),      # w3 (scale folded)
                pl.BlockSpec((1, OUT_P), lambda i: (0, 0)),             # bias
            ],
            out_specs=pl.BlockSpec((batch, OUT_P), lambda i: (0, 0)),
        ),
        compiler_params=pltpu.CompilerParams(
            dimension_semantics=("arbitrary",),
            vmem_limit_bytes=32 << 20,
        ),
        cost_estimate=pl.CostEstimate(
            flops=11_796_480,            # 2*B*(32*512 + 512*512 + 512*896)
            transcendentals=32_000,      # softplus exp/log1p + BN rsqrt
            bytes_accessed=1_507_328,    # bf16 weights + f32 bias/out + x
        ),
    )(x, w1, w2, w3, b3)
    return out_padded[:, :OUT_DIM]


def init_params(key):
    """Match the PyTorch module's initializers (weights stored transposed)."""
    k1, k2, k3, k4 = jax.random.split(key, 4)

    # kaiming_uniform_ (a=0): bound = sqrt(6 / fan_in)
    b1 = (6.0 / NOISE_DIM) ** 0.5
    w1 = jax.random.uniform(k1, (NOISE_DIM, HIDDEN), jnp.float32, -b1, b1)

    b2 = (6.0 / HIDDEN) ** 0.5
    w2 = jax.random.uniform(k2, (HIDDEN, HIDDEN), jnp.float32, -b2, b2)

    # weight_norm(Linear(500, 784)): default Linear init (kaiming_uniform a=sqrt(5))
    # => bound = 1/sqrt(fan_in); g initialized to ||v|| so W == v at init.
    b3v = (1.0 / HIDDEN) ** 0.5
    v3 = jax.random.uniform(k3, (HIDDEN, OUT_DIM), jnp.float32, -b3v, b3v)
    g3 = jnp.sqrt(jnp.sum(v3 * v3, axis=0, keepdims=True))       # (1, 784)
    b3 = jax.random.uniform(k4, (1, OUT_DIM), jnp.float32, -b3v, b3v)
    return w1, w2, v3, g3, b3


def prepare_params(w1, w2, v3, g3, b3):
    """Fold weight-norm into the layer-3 weight (parameter-only), zero-pad to
    lane-aligned shapes, and cast the large matrices to bf16.

    IMPORTANT: padded rows (HIDDEN:HIDDEN_P) of w2/w3 must stay exactly zero —
    the padded hidden activations are softplus(0)=ln2, not 0, after BN+Softplus.
    """
    # True weight-normalized weight W3 = g * v / ||v||, computed in f32 then cast.
    w3 = v3 * (g3 * jax.lax.rsqrt(jnp.sum(v3 * v3, axis=0, keepdims=True)))

    w1p = jnp.zeros((NOISE_DIM, HIDDEN_P), jnp.float32).at[:, :HIDDEN].set(w1)
    w2p = jnp.zeros((HIDDEN_P, HIDDEN_P), jnp.float32).at[:HIDDEN, :HIDDEN].set(w2)
    w3p = jnp.zeros((HIDDEN_P, OUT_P), jnp.float32).at[:HIDDEN, :OUT_DIM].set(w3)
    b3p = jnp.zeros((1, OUT_P), jnp.float32).at[:, :OUT_DIM].set(b3)

    return (w1p.astype(jnp.bfloat16), w2p.astype(jnp.bfloat16),
            w3p.astype(jnp.bfloat16), b3p)


if __name__ == "__main__":
    key = jax.random.PRNGKey(0)
    k_noise, k_params = jax.random.split(key)

    w1, w2, w3, b3 = prepare_params(*init_params(k_params))

    # forward(batch_size): x = torch.rand(batch_size, noise_dimension)
    # (noise generated in the wrapper; kernel does the compute)
    # TODO(synk): BatchNorm running-stat updates (momentum=0.5) are not materialized;
    #             this is the training-mode forward only, as in the reference forward().
    x = jax.random.uniform(k_noise, (BATCH, NOISE_DIM), jnp.float32).astype(jnp.bfloat16)

    out = generator_forward(x, w1, w2, w3, b3)
    out = jax.block_until_ready(out)

    assert out.shape == (BATCH, OUT_DIM)
    assert bool(jnp.all(jnp.isfinite(out)))
    assert bool(jnp.all(out >= 0.0))  # softplus output is non-negative
    print("KERNEL_OK")
</pallas_src>

<mosaic_0001>
module attributes {stable_mosaic.version = 11 : i64} {
  func.func @generator_kernel(%arg0: i32, %arg1: memref<8x32xbf16, #tpu.memory_space<vmem>>, %arg2: memref<32x512xbf16, #tpu.memory_space<vmem>>, %arg3: memref<512x512xbf16, #tpu.memory_space<vmem>>, %arg4: memref<512x896xbf16, #tpu.memory_space<vmem>>, %arg5: memref<1x896xf32, #tpu.memory_space<vmem>>, %arg6: memref<8x896xf32, #tpu.memory_space<vmem>>) attributes {dimension_semantics = [#tpu.dimension_semantics<arbitrary>], iteration_bounds = array<i64: 1>, scalar_prefetch = 0 : i64, scratch_operands = 0 : i64, tpu.core_type = #tpu.core_type<tc>, window_params = [{pipeline_mode = #tpu.pipeline_mode<synchronous>, transform_indices = @transform_0, window_bounds = array<i64: 8, 32>}, {pipeline_mode = #tpu.pipeline_mode<synchronous>, transform_indices = @transform_1, window_bounds = array<i64: 32, 512>}, {pipeline_mode = #tpu.pipeline_mode<synchronous>, transform_indices = @transform_2, window_bounds = array<i64: 512, 512>}, {pipeline_mode = #tpu.pipeline_mode<synchronous>, transform_indices = @transform_3, window_bounds = array<i64: 512, 896>}, {pipeline_mode = #tpu.pipeline_mode<synchronous>, transform_indices = @transform_4, window_bounds = array<i64: 1, 896>}, {pipeline_mode = #tpu.pipeline_mode<synchronous>, transform_indices = @transform_5, window_bounds = array<i64: 8, 896>}]} {
    %c0 = arith.constant 0 : index
    %c0_0 = arith.constant 0 : index
    %0 = vector.load %arg1[%c0, %c0_0] : memref<8x32xbf16, #tpu.memory_space<vmem>>, vector<8x32xbf16>
    %c0_1 = arith.constant 0 : index
    %c0_2 = arith.constant 0 : index
    %1 = vector.load %arg2[%c0_1, %c0_2] : memref<32x512xbf16, #tpu.memory_space<vmem>>, vector<32x512xbf16>
    %cst = arith.constant dense<0.000000e+00> : vector<8x512xf32>
    %2 = tpu.matmul %0, %1, %cst {dimension_numbers = #tpu.dot_dimension_numbers<[1], [0], [0], [1], [0, 0, 1, 1], [], []>} : vector<8x32xbf16>, vector<32x512xbf16>, vector<8x512xf32> -> vector<8x512xf32>
    %cst_3 = arith.constant dense<0.000000e+00> : vector<512xf32>
    %3 = vector.multi_reduction <add>, %2, %cst_3 [0] : vector<8x512xf32> to vector<512xf32>
    %4 = vector.shape_cast %3 : vector<512xf32> to vector<1x512xf32>
    %cst_4 = arith.constant 8.000000e+00 : f32
    %5 = vector.broadcast %cst_4 : f32 to vector<1x512xf32>
    %6 = arith.divf %4, %5 : vector<1x512xf32>
    %7 = vector.broadcast %6 : vector<1x512xf32> to vector<8x512xf32>
    %8 = arith.subf %2, %7 : vector<8x512xf32>
    %9 = vector.broadcast %6 : vector<1x512xf32> to vector<8x512xf32>
    %10 = arith.subf %2, %9 : vector<8x512xf32>
    %11 = arith.mulf %8, %10 : vector<8x512xf32>
    %cst_5 = arith.constant dense<0.000000e+00> : vector<512xf32>
    %12 = vector.multi_reduction <add>, %11, %cst_5 [0] : vector<8x512xf32> to vector<512xf32>
    %13 = vector.shape_cast %12 : vector<512xf32> to vector<1x512xf32>
    %cst_6 = arith.constant 8.000000e+00 : f32
    %14 = vector.broadcast %cst_6 : f32 to vector<1x512xf32>
    %15 = arith.divf %13, %14 : vector<1x512xf32>
    %16 = vector.broadcast %6 : vector<1x512xf32> to vector<8x512xf32>
    %17 = arith.subf %2, %16 : vector<8x512xf32>
    %cst_7 = arith.constant 9.99999997E-7 : f32
    %18 = vector.broadcast %cst_7 : f32 to vector<1x512xf32>
    %19 = arith.addf %15, %18 : vector<1x512xf32>
    %20 = math.rsqrt %19 : vector<1x512xf32>
    %21 = vector.broadcast %20 : vector<1x512xf32> to vector<8x512xf32>
    %22 = arith.mulf %17, %21 : vector<8x512xf32>
    %cst_8 = arith.constant 2.000000e+01 : f32
    %23 = vector.broadcast %cst_8 : f32 to vector<8x512xf32>
    %24 = arith.cmpf ogt, %22, %23 : vector<8x512xf32>
    %25 = math.exp %22 : vector<8x512xf32>
    %26 = math.log1p %25 : vector<8x512xf32>
    %27 = arith.select %24, %22, %26 : vector<8x512xi1>, vector<8x512xf32>
    %28 = arith.truncf %27 : vector<8x512xf32> to vector<8x512xbf16>
    %c0_9 = arith.constant 0 : index
    %c0_10 = arith.constant 0 : index
    %29 = vector.load %arg3[%c0_9, %c0_10] : memref<512x512xbf16, #tpu.memory_space<vmem>>, vector<512x512xbf16>
    %cst_11 = arith.constant dense<0.000000e+00> : vector<8x512xf32>
    %30 = tpu.matmul %28, %29, %cst_11 {dimension_numbers = #tpu.dot_dimension_numbers<[1], [0], [0], [1], [0, 0, 1, 1], [], []>} : vector<8x512xbf16>, vector<512x512xbf16>, vector<8x512xf32> -> vector<8x512xf32>
    %cst_12 = arith.constant dense<0.000000e+00> : vector<512xf32>
    %31 = vector.multi_reduction <add>, %30, %cst_12 [0] : vector<8x512xf32> to vector<512xf32>
    %32 = vector.shape_cast %31 : vector<512xf32> to vector<1x512xf32>
    %cst_13 = arith.constant 8.000000e+00 : f32
    %33 = vector.broadcast %cst_13 : f32 to vector<1x512xf32>
    %34 = arith.divf %32, %33 : vector<1x512xf32>
    %35 = vector.broadcast %34 : vector<1x512xf32> to vector<8x512xf32>
    %36 = arith.subf %30, %35 : vector<8x512xf32>
    %37 = vector.broadcast %34 : vector<1x512xf32> to vector<8x512xf32>
    %38 = arith.subf %30, %37 : vector<8x512xf32>
    %39 = arith.mulf %36, %38 : vector<8x512xf32>
    %cst_14 = arith.constant dense<0.000000e+00> : vector<512xf32>
    %40 = vector.multi_reduction <add>, %39, %cst_14 [0] : vector<8x512xf32> to vector<512xf32>
    %41 = vector.shape_cast %40 : vector<512xf32> to vector<1x512xf32>
    %cst_15 = arith.constant 8.000000e+00 : f32
    %42 = vector.broadcast %cst_15 : f32 to vector<1x512xf32>
    %43 = arith.divf %41, %42 : vector<1x512xf32>
    %44 = vector.broadcast %34 : vector<1x512xf32> to vector<8x512xf32>
    %45 = arith.subf %30, %44 : vector<8x512xf32>
    %cst_16 = arith.constant 9.99999997E-7 : f32
    %46 = vector.broadcast %cst_16 : f32 to vector<1x512xf32>
    %47 = arith.addf %43, %46 : vector<1x512xf32>
    %48 = math.rsqrt %47 : vector<1x512xf32>
    %49 = vector.broadcast %48 : vector<1x512xf32> to vector<8x512xf32>
    %50 = arith.mulf %45, %49 : vector<8x512xf32>
    %cst_17 = arith.constant 2.000000e+01 : f32
    %51 = vector.broadcast %cst_17 : f32 to vector<8x512xf32>
    %52 = arith.cmpf ogt, %50, %51 : vector<8x512xf32>
    %53 = math.exp %50 : vector<8x512xf32>
    %54 = math.log1p %53 : vector<8x512xf32>
    %55 = arith.select %52, %50, %54 : vector<8x512xi1>, vector<8x512xf32>
    %56 = arith.truncf %55 : vector<8x512xf32> to vector<8x512xbf16>
    %c0_18 = arith.constant 0 : index
    %c0_19 = arith.constant 0 : index
    %57 = vector.load %arg4[%c0_18, %c0_19] : memref<512x896xbf16, #tpu.memory_space<vmem>>, vector<512x896xbf16>
    %cst_20 = arith.constant dense<0.000000e+00> : vector<8x896xf32>
    %58 = tpu.matmul %56, %57, %cst_20 {dimension_numbers = #tpu.dot_dimension_numbers<[1], [0], [0], [1], [0, 0, 1, 1], [], []>} : vector<8x512xbf16>, vector<512x896xbf16>, vector<8x896xf32> -> vector<8x896xf32>
    %c0_21 = arith.constant 0 : index
    %c0_22 = arith.constant 0 : index
    %59 = vector.load %arg5[%c0_21, %c0_22] : memref<1x896xf32, #tpu.memory_space<vmem>>, vector<1x896xf32>
    %60 = vector.broadcast %59 : vector<1x896xf32> to vector<8x896xf32>
    %61 = arith.addf %58, %60 : vector<8x896xf32>
    %cst_23 = arith.constant 2.000000e+01 : f32
    %62 = vector.broadcast %cst_23 : f32 to vector<8x896xf32>
    %63 = arith.cmpf ogt, %61, %62 : vector<8x896xf32>
    %64 = math.exp %61 : vector<8x896xf32>
    %65 = math.log1p %64 : vector<8x896xf32>
    %66 = arith.select %63, %61, %65 : vector<8x896xi1>, vector<8x896xf32>
    %c0_24 = arith.constant 0 : index
    %c0_25 = arith.constant 0 : index
    %67 = vector.load %arg6[%c0_24, %c0_25] : memref<8x896xf32, #tpu.memory_space<vmem>>, vector<8x896xf32>
    tpu.vector_store %arg6[%c0_24, %c0_25], %66 {strides = array<i32>} : memref<8x896xf32, #tpu.memory_space<vmem>>, vector<8x896xf32>,
    return
  }
  func.func @transform_0(%arg0: i32) -> (i32, i32) {
    %c0_i32 = arith.constant 0 : i32
    %c0_i32_0 = arith.constant 0 : i32
    %c0_i32_1 = arith.constant 0 : i32
    return %c0_i32, %c0_i32_0 : i32, i32
  }
  func.func @transform_1(%arg0: i32) -> (i32, i32) {
    %c0_i32 = arith.constant 0 : i32
    %c0_i32_0 = arith.constant 0 : i32
    %c0_i32_1 = arith.constant 0 : i32
    return %c0_i32, %c0_i32_0 : i32, i32
  }
  func.func @transform_2(%arg0: i32) -> (i32, i32) {
    %c0_i32 = arith.constant 0 : i32
    %c0_i32_0 = arith.constant 0 : i32
    %c0_i32_1 = arith.constant 0 : i32
    return %c0_i32, %c0_i32_0 : i32, i32
  }
  func.func @transform_3(%arg0: i32) -> (i32, i32) {
    %c0_i32 = arith.constant 0 : i32
    %c0_i32_0 = arith.constant 0 : i32
    %c0_i32_1 = arith.constant 0 : i32
    return %c0_i32, %c0_i32_0 : i32, i32
  }
  func.func @transform_4(%arg0: i32) -> (i32, i32) {
    %c0_i32 = arith.constant 0 : i32
    %c0_i32_0 = arith.constant 0 : i32
    %c0_i32_1 = arith.constant 0 : i32
    return %c0_i32, %c0_i32_0 : i32, i32
  }
  func.func @transform_5(%arg0: i32) -> (i32, i32) {
    %c0_i32 = arith.constant 0 : i32
    %c0_i32_0 = arith.constant 0 : i32
    %c0_i32_1 = arith.constant 0 : i32
    return %c0_i32, %c0_i32_0 : i32, i32
  }
}

</mosaic_0001>

<llo_original>
// kernel: tpu_custom_call.1
$region0: #{tpu_custom_call.1}
  #allocation0 [shape = 'u32[]', space=smem, size = 0x4, offset = 0x4, fixed_abs, tag = 'smem constant byte address 0x4 - core index']
  #allocation1 [shape = 'u32[144,128]{1,0:T(1,128)}', space=vmem, size = 0x12000, scoped, tag = 'internal scratch']
  %s0 = inlined_call_operand.hbm [shape: bf16[8,32], index: 0, kind: input, shape index: {}]
  %s1 = inlined_call_operand.hbm [shape: bf16[32,512], index: 1, kind: input, shape index: {}]
  %s2 = inlined_call_operand.hbm [shape: bf16[512,512], index: 2, kind: input, shape index: {}]
  %s3 = inlined_call_operand.hbm [shape: bf16[512,896], index: 3, kind: input, shape index: {}]
  %s4 = inlined_call_operand.vmem [shape: f32[1,896], index: 4, kind: input, shape index: {}]
  %s5 = inlined_call_operand.hbm [shape: f32[8,896], index: 5, kind: output, shape index: {}]
  %s6 = sld [smem:[#allocation0]]
  $region46: #{tpu_custom_call.1} parent=0
    _
  %s8 = ssub.s32 1, %s6
  %s9 = scalar_select 0, %s8, %s6
  $region1: #{tpu_custom_call.1} parent=0
    #allocation2 [shape = 'u8[2048]{0}', space=vmem, size = 0x800, scoped, tag = 'input window, operand 0, single buffered']
    #allocation3 [shape = 's32[1]{0}', space=sflag, size = 0x4, scoped, tag = 'scoped memory for tpu_custom_call.1']
    #allocation4 [shape = 's32[1]{0}', space=sflag, size = 0x4, scoped, tag = 'scoped memory for tpu_custom_call.1']
    #allocation5 [shape = 'u8[32768]{0}', space=vmem, size = 0x8000, scoped, tag = 'input window, operand 1, single buffered']
    #allocation6 [shape = 's32[1]{0}', space=sflag, size = 0x4, scoped, tag = 'scoped memory for tpu_custom_call.1']
    #allocation7 [shape = 'u8[524288]{0}', space=vmem, size = 0x80000, scoped, tag = 'input window, operand 2, single buffered']
    #allocation8 [shape = 'u8[917504]{0}', space=vmem, size = 0xe0000, scoped, tag = 'input window, operand 3, single buffered']
    #allocation9 [shape = 's32[1]{0}', space=sflag, size = 0x4, scoped, tag = 'scoped memory for tpu_custom_call.1']
    #allocation10 [shape = 'u8[28672]{0}', space=vmem, size = 0x7000, scoped, tag = 'output window, operand 0, single buffered']
    %10 = vsyncpa [#allocation3], 0
    %11 = vsyncpa [#allocation6], 0
    %12 = vsyncpa [#allocation9], 0
    %13 = vsyncpa [#allocation4], 0
    // Predicated region
    $region2: #{tpu_custom_call.1} parent=1 // pred_check
      _
    $region3: #{tpu_custom_call.1} parent=1 // pred_check_branch
      %15 = sbr.rel (0) target = $region5
    $region4: #{tpu_custom_call.1} parent=1 // pred_region
      %s17 = ssub.s32 64, 64
      %18 = vsyncadd [#allocation3], %s17
      %s20 = sshll.u32 [#allocation2], 4
      %s21 = int_to_ptr.vmem [resolvable:$true] %s20
      %23 = dma.hbm_to_vmem [thread:$0]  %s0, 64, %s21, [#allocation3]
    $region5: #{tpu_custom_call.1} parent=1 // pred_fallthru
      _
    // Predicated region
    $region6: #{tpu_custom_call.1} parent=1 // pred_check
      _
    $region7: #{tpu_custom_call.1} parent=1 // pred_check_branch
      %25 = sbr.rel (0) target = $region9
    $region8: #{tpu_custom_call.1} parent=1 // pred_region
      %s27 = ssub.s32 1024, 1024
      %28 = vsyncadd [#allocation6], %s27
      %s29 = sshll.u32 [#allocation5], 4
      %s30 = int_to_ptr.vmem [resolvable:$true] %s29
      %35 = dma.hbm_to_vmem [thread:$0]  %s1, 1024, %s30, [#allocation6], 256, 256, 16
    $region9: #{tpu_custom_call.1} parent=1 // pred_fallthru
      _
    // Predicated region
    $region10: #{tpu_custom_call.1} parent=1 // pred_check
      _
    $region11: #{tpu_custom_call.1} parent=1 // pred_check_branch
      %37 = sbr.rel (0) target = $region13
    $region12: #{tpu_custom_call.1} parent=1 // pred_region
      %s39 = ssub.s32 16384, 16384
      %40 = vsyncadd [#allocation6], %s39
      %s41 = sshll.u32 [#allocation7], 4
      %s42 = int_to_ptr.vmem [resolvable:$true] %s41
      %47 = dma.hbm_to_vmem [thread:$0]  %s2, 16384, %s42, [#allocation6], 256, 256, 16
    $region13: #{tpu_custom_call.1} parent=1 // pred_fallthru
      _
    // Predicated region
    $region14: #{tpu_custom_call.1} parent=1 // pred_check
      _
    $region15: #{tpu_custom_call.1} parent=1 // pred_check_branch
      %49 = sbr.rel (0) target = $region17
    $region16: #{tpu_custom_call.1} parent=1 // pred_region
      %s51 = ssub.s32 28672, 28672
      %52 = vsyncadd [#allocation9], %s51
      %s53 = sshll.u32 [#allocation8], 4
      %s54 = int_to_ptr.vmem [resolvable:$true] %s53
      %59 = dma.hbm_to_vmem [thread:$0]  %s3, 28672, %s54, [#allocation9], 448, 448, 28
    $region17: #{tpu_custom_call.1} parent=1 // pred_fallthru
      _
    // Predicated region
    $region18: #{tpu_custom_call.1} parent=1 // pred_check
      _
    $region19: #{tpu_custom_call.1} parent=1 // pred_check_branch
      %61 = sbr.rel (0) target = $region21
    $region20: #{tpu_custom_call.1} parent=1 // pred_region
      _
    $region21: #{tpu_custom_call.1} parent=1 // pred_fallthru
      _
    // Predicated region
    $region22: #{tpu_custom_call.1} parent=1 // pred_check
      _
    $region23: #{tpu_custom_call.1} parent=1 // pred_check_branch
      %63 = sbr.rel (0) target = $region25
    $region24: #{tpu_custom_call.1} parent=1 // pred_region
      %64 = dma.done [#allocation3], 64
    $region25: #{tpu_custom_call.1} parent=1 // pred_fallthru
      _
    // Predicated region
    $region26: #{tpu_custom_call.1} parent=1 // pred_check
      _
    $region27: #{tpu_custom_call.1} parent=1 // pred_check_branch
      %66 = sbr.rel (0) target = $region29
    $region28: #{tpu_custom_call.1} parent=1 // pred_region
      %67 = dma.done [#allocation6], 1024
    $region29: #{tpu_custom_call.1} parent=1 // pred_fallthru
      _
    // Predicated region
    $region30: #{tpu_custom_call.1} parent=1 // pred_check
      _
    $region31: #{tpu_custom_call.1} parent=1 // pred_check_branch
      %69 = sbr.rel (0) target = $region33
    $region32: #{tpu_custom_call.1} parent=1 // pred_region
      %70 = dma.done [#allocation6], 16384
    $region33: #{tpu_custom_call.1} parent=1 // pred_fallthru
      _
    // Predicated region
    $region34: #{tpu_custom_call.1} parent=1 // pred_check
      _
    $region35: #{tpu_custom_call.1} parent=1 // pred_check_branch
      %72 = sbr.rel (0) target = $region37
    $region36: #{tpu_custom_call.1} parent=1 // pred_region
      %73 = dma.done [#allocation9], 28672
    $region37: #{tpu_custom_call.1} parent=1 // pred_fallthru
      _
    %v75 = vld [vmem:[#allocation2] sm:$0xf]
    %v76 = vld [vmem:[#allocation5] sm:$0xff]
    %v77 = vld [vmem:[#allocation5 + $0x8] sm:$0xff]
    %v78 = vld [vmem:[#allocation5 + $0x10] sm:$0xff]
    %v79 = vld [vmem:[#allocation5 + $0x18] sm:$0xff]
    %v80 = vld [vmem:[#allocation5 + $0x20] sm:$0xff]
    %v81 = vld [vmem:[#allocation5 + $0x28] sm:$0xff]
    %v82 = vld [vmem:[#allocation5 + $0x30] sm:$0xff]
    %v83 = vld [vmem:[#allocation5 + $0x38] sm:$0xff]
    %v92 = vunpack.c.l.b16 %v76
    %v93 = vunpack.c.h.b16 %v76
    %v94 = vunpack.c.l.b16 %v77
    %v95 = vunpack.c.h.b16 %v77
    %v96 = vunpack.c.l.b16 %v78
    %v97 = vunpack.c.h.b16 %v78
    %v98 = vunpack.c.l.b16 %v79
    %v99 = vunpack.c.h.b16 %v79
    %v100 = vunpack.c.l.b16 %v80
    %v101 = vunpack.c.h.b16 %v80
    %v102 = vunpack.c.l.b16 %v81
    %v103 = vunpack.c.h.b16 %v81
    %v104 = vunpack.c.l.b16 %v82
    %v105 = vunpack.c.h.b16 %v82
    %v106 = vunpack.c.l.b16 %v83
    %v107 = vunpack.c.h.b16 %v83
    %v108 = vpack.c.b16 %v96, %v92
    %v109 = vpack.c.b16 %v97, %v93
    %v110 = vpack.c.b16 %v98, %v94
    %v111 = vpack.c.b16 %v99, %v95
    %v112 = vpack.c.b16 %v104, %v100
    %v113 = vpack.c.b16 %v105, %v101
    %v114 = vpack.c.b16 %v106, %v102
    %v115 = vpack.c.b16 %v107, %v103
    %vm124 = vcmask 261120
    %v126 = vsel %vm124, %v75, 0
    %128 = vmatprep.subr.bf16.mxu0 %v109
    %129 = vmatpush1.bf16.msra.mxu0 %v108
    %130 = vmatprep.subr.bf16.mxu0 %v113
    %131 = vmatpush1.bf16.msra.mxu0 %v112
    %132 = vmatprep.subr.bf16.mxu0 0
    %133 = vmatpush1.bf16.msra.mxu0 0
    %134 = vmatprep.subr.bf16.mxu0 0
    %135 = vmatpush1.bf16.msra.mxu0 0
    %136 = vmatprep.subr.bf16.mxu0 0
    %137 = vmatpush1.bf16.msra.mxu0 0
    %138 = vmatprep.subr.bf16.mxu0 0
    %139 = vmatpush1.bf16.msra.mxu0 0
    %140 = vmatprep.subr.bf16.mxu0 0
    %141 = vmatpush1.bf16.msra.mxu0 0
    %142 = vmatprep.subr.bf16.mxu0 0
    %143 = vmatpush1.bf16.msra.mxu0 0
    %144 = vmatprep.subr.bf16.mxu0 0
    %145 = vmatpush1.bf16.msra.mxu0 0
    %146 = vmatprep.subr.bf16.mxu0 0
    %147 = vmatpush1.bf16.msra.mxu0 0
    %148 = vmatprep.subr.bf16.mxu0 0
    %149 = vmatpush1.bf16.msra.mxu0 0
    %150 = vmatprep.subr.bf16.mxu0 0
    %151 = vmatpush1.bf16.msra.mxu0 0
    %152 = vmatprep.subr.bf16.mxu0 0
    %153 = vmatpush1.bf16.msra.mxu0 0
    %154 = vmatprep.subr.bf16.mxu0 0
    %155 = vmatpush1.bf16.msra.mxu0 0
    %156 = vmatprep.subr.bf16.mxu0 0
    %157 = vmatpush1.bf16.msra.mxu0 0
    %158 = vmatprep.subr.bf16.mxu0 0
    %159 = vmatpush1.bf16.msra.mxu0 0
    %160 = vmatprep.mubr.bf16.mxu0 0
    %161 = vmatmul.mubr.bf16.gmra.mrb[0].mxu0 %v126
    %v162 = vpop.f32.mrb[0].mxu0
    %v163 = vadd.f32 0.0, %v162
    %v164 = vpop.f32.mrb[0].mxu0
    %v165 = vadd.f32 0.0, %v164
    %v166 = vpop.f32.mrb[0].mxu0
    %v167 = vpop.f32.mrb[0].mxu0
    %168 = vdwg.mxu0
    %169 = vmatprep.subr.bf16.mxu0 %v111
    %170 = vmatpush1.bf16.msra.mxu0 %v110
    %171 = vmatprep.subr.bf16.mxu0 %v115
    %172 = vmatpush1.bf16.msra.mxu0 %v114
    %173 = vmatprep.subr.bf16.mxu0 0
    %174 = vmatpush1.bf16.msra.mxu0 0
    %175 = vmatprep.subr.bf16.mxu0 0
    %176 = vmatpush1.bf16.msra.mxu0 0
    %177 = vmatprep.subr.bf16.mxu0 0
    %178 = vmatpush1.bf16.msra.mxu0 0
    %179 = vmatprep.subr.bf16.mxu0 0
    %180 = vmatpush1.bf16.msra.mxu0 0
    %181 = vmatprep.subr.bf16.mxu0 0
    %182 = vmatpush1.bf16.msra.mxu0 0
    %183 = vmatprep.subr.bf16.mxu0 0
    %184 = vmatpush1.bf16.msra.mxu0 0
    %185 = vmatprep.subr.bf16.mxu0 0
    %186 = vmatpush1.bf16.msra.mxu0 0
    %187 = vmatprep.subr.bf16.mxu0 0
    %188 = vmatpush1.bf16.msra.mxu0 0
    %189 = vmatprep.subr.bf16.mxu0 0
    %190 = vmatpush1.bf16.msra.mxu0 0
    %191 = vmatprep.subr.bf16.mxu0 0
    %192 = vmatpush1.bf16.msra.mxu0 0
    %193 = vmatprep.subr.bf16.mxu0 0
    %194 = vmatpush1.bf16.msra.mxu0 0
    %195 = vmatprep.subr.bf16.mxu0 0
    %196 = vmatpush1.bf16.msra.mxu0 0
    %197 = vmatprep.subr.bf16.mxu0 0
    %198 = vmatpush1.bf16.msra.mxu0 0
    %199 = vmatprep.subr.bf16.mxu0 0
    %200 = vmatpush1.bf16.msra.mxu0 0
    %201 = vmatprep.mubr.bf16.mxu0 0
    %202 = vmatmul.mubr.bf16.gmra.mrb[0].mxu0 %v126
    %v203 = vpop.f32.mrb[0].mxu0
    %v204 = vadd.f32 0.0, %v203
    %v205 = vpop.f32.mrb[0].mxu0
    %v206 = vadd.f32 0.0, %v205
    %v207 = vpop.f32.mrb[0].mxu0
    %v208 = vpop.f32.mrb[0].mxu0
    %209 = vdwg.mxu0
    %v210 = vrot.slane %v163, 4
    %v211 = vadd.f32 %v163, %v210
    %v212 = vrot.slane %v211, 2
    %v213 = vadd.f32 %v211, %v212
    %v214 = vrot.slane %v213, 1
    %v215 = vadd.f32 %v213, %v214
    %v216 = vrot.slane %v165, 4
    %v217 = vadd.f32 %v165, %v216
    %v218 = vrot.slane %v217, 2
    %v219 = vadd.f32 %v217, %v218
    %v220 = vrot.slane %v219, 1
    %v221 = vadd.f32 %v219, %v220
    %v222 = vrot.slane %v204, 4
    %v223 = vadd.f32 %v204, %v222
    %v224 = vrot.slane %v223, 2
    %v225 = vadd.f32 %v223, %v224
    %v226 = vrot.slane %v225, 1
    %v227 = vadd.f32 %v225, %v226
    %v228 = vrot.slane %v206, 4
    %v229 = vadd.f32 %v206, %v228
    %v230 = vrot.slane %v229, 2
    %v231 = vadd.f32 %v229, %v230
    %v232 = vrot.slane %v231, 1
    %v233 = vadd.f32 %v231, %v232
    %v234 = vrcp.pop 8.0
    %v235 = vmul.f32 %v215, %v234
    %v236 = vmul.f32 %v221, %v234
    %v237 = vmul.f32 %v227, %v234
    %v238 = vmul.f32 %v233, %v234
    %v239 = vsub.f32 %v163, %v235
    %v240 = vsub.f32 %v165, %v236
    %v241 = vsub.f32 %v204, %v237
    %v242 = vsub.f32 %v206, %v238
    %v243 = vmul.f32 %v239, %v239
    %v244 = vmul.f32 %v240, %v240
    %v245 = vmul.f32 %v241, %v241
    %v246 = vmul.f32 %v242, %v242
    %v247 = vrot.slane %v243, 4
    %v248 = vadd.f32 %v243, %v247
    %v249 = vrot.slane %v248, 2
    %v250 = vadd.f32 %v248, %v249
    %v251 = vrot.slane %v250, 1
    %v252 = vadd.f32 %v250, %v251
    %v253 = vrot.slane %v244, 4
    %v254 = vadd.f32 %v244, %v253
    %v255 = vrot.slane %v254, 2
    %v256 = vadd.f32 %v254, %v255
    %v257 = vrot.slane %v256, 1
    %v258 = vadd.f32 %v256, %v257
    %v259 = vrot.slane %v245, 4
    %v260 = vadd.f32 %v245, %v259
    %v261 = vrot.slane %v260, 2
    %v262 = vadd.f32 %v260, %v261
    %v263 = vrot.slane %v262, 1
    %v264 = vadd.f32 %v262, %v263
    %v265 = vrot.slane %v246, 4
    %v266 = vadd.f32 %v246, %v265
    %v267 = vrot.slane %v266, 2
    %v268 = vadd.f32 %v266, %v267
    %v269 = vrot.slane %v268, 1
    %v270 = vadd.f32 %v268, %v269
    %v271 = vmul.f32 %v252, %v234
    %v272 = vmul.f32 %v258, %v234
    %v273 = vmul.f32 %v264, %v234
    %v274 = vmul.f32 %v270, %v234
    %v275 = vadd.f32 %v271, 1e-06
    %v276 = vadd.f32 %v272, 1e-06
    %v277 = vadd.f32 %v273, 1e-06
    %v278 = vadd.f32 %v274, 1e-06
    %v279 = vrsqrt.pop %v275
    %v280 = vrsqrt.pop %v276
    %v281 = vrsqrt.pop %v277
    %v282 = vrsqrt.pop %v278
    %v283 = vmul.f32 %v239, %v279
    %v284 = vmul.f32 %v240, %v280
    %v285 = vmul.f32 %v241, %v281
    %v286 = vmul.f32 %v242, %v282
    %vm287 = vcmp.gt.f32.partialorder %v283, 20.0
    %vm288 = vcmp.gt.f32.partialorder %v284, 20.0
    %vm289 = vcmp.gt.f32.partialorder %v285, 20.0
    %vm290 = vcmp.gt.f32.partialorder %v286, 20.0
    %v291 = vmul.f32 %v283, 1.442695
    %v292 = vpow.pop %v291
    %v293 = vmul.f32 %v284, 1.442695
    %v294 = vpow.pop %v293
    %v295 = vmul.f32 %v285, 1.442695
    %v296 = vpow.pop %v295
    %v297 = vmul.f32 %v286, 1.442695
    %v298 = vpow.pop %v297
    %v299 = vadd.f32 %v292, 1.0
    %v300 = vlog2.pop %v299
    %v301 = vmul.f32 %v300, 0.6931472
    %v302 = vmul.f32 -0.5, %v292
    %v303 = vadd.f32 %v302, 1.0
    %v304 = vmul.f32 %v303, %v292
    %v305 = vand.u32 2147483647, %v292
    %vm306 = vcmp.lt.f32.partialorder %v305, 0.0004427343
    %v307 = vsel %vm306, %v304, %v301
    %v308 = vadd.f32 %v294, 1.0
    %v309 = vlog2.pop %v308
    %v310 = vmul.f32 %v309, 0.6931472
    %v311 = vmul.f32 -0.5, %v294
    %v312 = vadd.f32 %v311, 1.0
    %v313 = vmul.f32 %v312, %v294
    %v314 = vand.u32 2147483647, %v294
    %vm315 = vcmp.lt.f32.partialorder %v314, 0.0004427343
    %v316 = vsel %vm315, %v313, %v310
    %v317 = vadd.f32 %v296, 1.0
    %v318 = vlog2.pop %v317
    %v319 = vmul.f32 %v318, 0.6931472
    %v320 = vmul.f32 -0.5, %v296
    %v321 = vadd.f32 %v320, 1.0
    %v322 = vmul.f32 %v321, %v296
    %v323 = vand.u32 2147483647, %v296
    %vm324 = vcmp.lt.f32.partialorder %v323, 0.0004427343
    %v325 = vsel %vm324, %v322, %v319
    %v326 = vadd.f32 %v298, 1.0
    %v327 = vlog2.pop %v326
    %v328 = vmul.f32 %v327, 0.6931472
    %v329 = vmul.f32 -0.5, %v298
    %v330 = vadd.f32 %v329, 1.0
    %v331 = vmul.f32 %v330, %v298
    %v332 = vand.u32 2147483647, %v298
    %vm333 = vcmp.lt.f32.partialorder %v332, 0.0004427343
    %v334 = vsel %vm333, %v331, %v328
    %v335 = vsel %vm287, %v283, %v307
    %v336 = vsel %vm288, %v284, %v316
    %v337 = vsel %vm289, %v285, %v325
    %v338 = vsel %vm290, %v286, %v334
    %v339 = vpack.c.bf16 %v335, %v335
    %v340 = vpack.c.bf16 %v336, %v336
    %v341 = vpack.c.bf16 %v337, %v337
    %v342 = vpack.c.bf16 %v338, %v338
    %v343 = vld [vmem:[#allocation7] sm:$0xff]
    %v344 = vld [vmem:[#allocation7 + $0x8] sm:$0xff]
    %v345 = vld [vmem:[#allocation7 + $0x10] sm:$0xff]
    %v346 = vld [vmem:[#allocation7 + $0x18] sm:$0xff]
    %v347 = vld [vmem:[#allocation7 + $0x20] sm:$0xff]
    %v348 = vld [vmem:[#allocation7 + $0x28] sm:$0xff]
    %v349 = vld [vmem:[#allocation7 + $0x30] sm:$0xff]
    %v350 = vld [vmem:[#allocation7 + $0x38] sm:$0xff]
    %v351 = vld [vmem:[#allocation7 + $0x40] sm:$0xff]
    %v352 = vld [vmem:[#allocation7 + $0x48] sm:$0xff]
    %v353 = vld [vmem:[#allocation7 + $0x50] sm:$0xff]
    %v354 = vld [vmem:[#allocation7 + $0x58] sm:$0xff]
    %v355 = vld [vmem:[#allocation7 + $0x60] sm:$0xff]
    %v356 = vld [vmem:[#allocation7 + $0x68] sm:$0xff]
    %v357 = vld [vmem:[#allocation7 + $0x70] sm:$0xff]
    %v358 = vld [vmem:[#allocation7 + $0x78] sm:$0xff]
    %v359 = vld [vmem:[#allocation7 + $0x80] sm:$0xff]
    %v360 = vld [vmem:[#allocation7 + $0x88] sm:$0xff]
    %v361 = vld [vmem:[#allocation7 + $0x90] sm:$0xff]
    %v362 = vld [vmem:[#allocation7 + $0x98] sm:$0xff]
    %v363 = vld [vmem:[#allocation7 + $0xa0] sm:$0xff]
    %v364 = vld [vmem:[#allocation7 + $0xa8] sm:$0xff]
    %v365 = vld [vmem:[#allocation7 + $0xb0] sm:$0xff]
    %v366 = vld [vmem:[#allocation7 + $0xb8] sm:$0xff]
    %v367 = vld [vmem:[#allocation7 + $0xc0] sm:$0xff]
    %v368 = vld [vmem:[#allocation7 + $0xc8] sm:$0xff]
    %v369 = vld [vmem:[#allocation7 + $0xd0] sm:$0xff]
    %v370 = vld [vmem:[#allocation7 + $0xd8] sm:$0xff]
    %v371 = vld [vmem:[#allocation7 + $0xe0] sm:$0xff]
    %v372 = vld [vmem:[#allocation7 + $0xe8] sm:$0xff]
    %v373 = vld [vmem:[#allocation7 + $0xf0] sm:$0xff]
    %v374 = vld [vmem:[#allocation7 + $0xf8] sm:$0xff]
    %v375 = vld [vmem:[#allocation7 + $0x100] sm:$0xff]
    %v376 = vld [vmem:[#allocation7 + $0x108] sm:$0xff]
    %v377 = vld [vmem:[#allocation7 + $0x110] sm:$0xff]
    %v378 = vld [vmem:[#allocation7 + $0x118] sm:$0xff]
    %v379 = vld [vmem:[#allocation7 + $0x120] sm:$0xff]
    %v380 = vld [vmem:[#allocation7 + $0x128] sm:$0xff]
    %v381 = vld [vmem:[#allocation7 + $0x130] sm:$0xff]
    %v382 = vld [vmem:[#allocation7 + $0x138] sm:$0xff]
    %v383 = vld [vmem:[#allocation7 + $0x140] sm:$0xff]
    %v384 = vld [vmem:[#allocation7 + $0x148] sm:$0xff]
    %v385 = vld [vmem:[#allocation7 + $0x150] sm:$0xff]
    %v386 = vld [vmem:[#allocation7 + $0x158] sm:$0xff]
    %v387 = vld [vmem:[#allocation7 + $0x160] sm:$0xff]
    %v388 = vld [vmem:[#allocation7 + $0x168] sm:$0xff]
    %v389 = vld [vmem:[#allocation7 + $0x170] sm:$0xff]
    %v390 = vld [vmem:[#allocation7 + $0x178] sm:$0xff]
    %v391 = vld [vmem:[#allocation7 + $0x180] sm:$0xff]
    %v392 = vld [vmem:[#allocation7 + $0x188] sm:$0xff]
    %v393 = vld [vmem:[#allocation7 + $0x190] sm:$0xff]
    %v394 = vld [vmem:[#allocation7 + $0x198] sm:$0xff]
    %v395 = vld [vmem:[#allocation7 + $0x1a0] sm:$0xff]
    %v396 = vld [vmem:[#allocation7 + $0x1a8] sm:$0xff]
    %v397 = vld [vmem:[#allocation7 + $0x1b0] sm:$0xff]
    %v398 = vld [vmem:[#allocation7 + $0x1b8] sm:$0xff]
    %v399 = vld [vmem:[#allocation7 + $0x1c0] sm:$0xff]
    %v400 = vld [vmem:[#allocation7 + $0x1c8] sm:$0xff]
    %v401 = vld [vmem:[#allocation7 + $0x1d0] sm:$0xff]
    %v402 = vld [vmem:[#allocation7 + $0x1d8] sm:$0xff]
    %v403 = vld [vmem:[#allocation7 + $0x1e0] sm:$0xff]
    %v404 = vld [vmem:[#allocation7 + $0x1e8] sm:$0xff]
    %v405 = vld [vmem:[#allocation7 + $0x1f0] sm:$0xff]
    %v406 = vld [vmem:[#allocation7 + $0x1f8] sm:$0xff]
    %v407 = vld [vmem:[#allocation7 + $0x200] sm:$0xff]
    %v408 = vld [vmem:[#allocation7 + $0x208] sm:$0xff]
    %v409 = vld [vmem:[#allocation7 + $0x210] sm:$0xff]
    %v410 = vld [vmem:[#allocation7 + $0x218] sm:$0xff]
    %v411 = vld [vmem:[#allocation7 + $0x220] sm:$0xff]
    %v412 = vld [vmem:[#allocation7 + $0x228] sm:$0xff]
    %v413 = vld [vmem:[#allocation7 + $0x230] sm:$0xff]
    %v414 = vld [vmem:[#allocation7 + $0x238] sm:$0xff]
    %v415 = vld [vmem:[#allocation7 + $0x240] sm:$0xff]
    %v416 = vld [vmem:[#allocation7 + $0x248] sm:$0xff]
    %v417 = vld [vmem:[#allocation7 + $0x250] sm:$0xff]
    %v418 = vld [vmem:[#allocation7 + $0x258] sm:$0xff]
    %v419 = vld [vmem:[#allocation7 + $0x260] sm:$0xff]
    %v420 = vld [vmem:[#allocation7 + $0x268] sm:$0xff]
    %v421 = vld [vmem:[#allocation7 + $0x270] sm:$0xff]
    %v422 = vld [vmem:[#allocation7 + $0x278] sm:$0xff]
    %v423 = vld [vmem:[#allocation7 + $0x280] sm:$0xff]
    %v424 = vld [vmem:[#allocation7 + $0x288] sm:$0xff]
    %v425 = vld [vmem:[#allocation7 + $0x290] sm:$0xff]
    %v426 = vld [vmem:[#allocation7 + $0x298] sm:$0xff]
    %v427 = vld [vmem:[#allocation7 + $0x2a0] sm:$0xff]
    %v428 = vld [vmem:[#allocation7 + $0x2a8] sm:$0xff]
    %v429 = vld [vmem:[#allocation7 + $0x2b0] sm:$0xff]
    %v430 = vld [vmem:[#allocation7 + $0x2b8] sm:$0xff]
    %v431 = vld [vmem:[#allocation7 + $0x2c0] sm:$0xff]
    %v432 = vld [vmem:[#allocation7 + $0x2c8] sm:$0xff]
    %v433 = vld [vmem:[#allocation7 + $0x2d0] sm:$0xff]
    %v434 = vld [vmem:[#allocation7 + $0x2d8] sm:$0xff]
    %v435 = vld [vmem:[#allocation7 + $0x2e0] sm:$0xff]
    %v436 = vld [vmem:[#allocation7 + $0x2e8] sm:$0xff]
    %v437 = vld [vmem:[#allocation7 + $0x2f0] sm:$0xff]
    %v438 = vld [vmem:[#allocation7 + $0x2f8] sm:$0xff]
    %v439 = vld [vmem:[#allocation7 + $0x300] sm:$0xff]
    %v440 = vld [vmem:[#allocation7 + $0x308] sm:$0xff]
    %v441 = vld [vmem:[#allocation7 + $0x310] sm:$0xff]
    %v442 = vld [vmem:[#allocation7 + $0x318] sm:$0xff]
    %v443 = vld [vmem:[#allocation7 + $0x320] sm:$0xff]
    %v444 = vld [vmem:[#allocation7 + $0x328] sm:$0xff]
    %v445 = vld [vmem:[#allocation7 + $0x330] sm:$0xff]
    %v446 = vld [vmem:[#allocation7 + $0x338] sm:$0xff]
    %v447 = vld [vmem:[#allocation7 + $0x340] sm:$0xff]
    %v448 = vld [vmem:[#allocation7 + $0x348] sm:$0xff]
    %v449 = vld [vmem:[#allocation7 + $0x350] sm:$0xff]
    %v450 = vld [vmem:[#allocation7 + $0x358] sm:$0xff]
    %v451 = vld [vmem:[#allocation7 + $0x360] sm:$0xff]
    %v452 = vld [vmem:[#allocation7 + $0x368] sm:$0xff]
    %v453 = vld [vmem:[#allocation7 + $0x370] sm:$0xff]
    %v454 = vld [vmem:[#allocation7 + $0x378] sm:$0xff]
    %v455 = vld [vmem:[#allocation7 + $0x380] sm:$0xff]
    %v456 = vld [vmem:[#allocation7 + $0x388] sm:$0xff]
    %v457 = vld [vmem:[#allocation7 + $0x390] sm:$0xff]
    %v458 = vld [vmem:[#allocation7 + $0x398] sm:$0xff]
    %v459 = vld [vmem:[#allocation7 + $0x3a0] sm:$0xff]
    %v460 = vld [vmem:[#allocation7 + $0x3a8] sm:$0xff]
    %v461 = vld [vmem:[#allocation7 + $0x3b0] sm:$0xff]
    %v462 = vld [vmem:[#allocation7 + $0x3b8] sm:$0xff]
    %v463 = vld [vmem:[#allocation7 + $0x3c0] sm:$0xff]
    %v464 = vld [vmem:[#allocation7 + $0x3c8] sm:$0xff]
    %v465 = vld [vmem:[#allocation7 + $0x3d0] sm:$0xff]
    %v466 = vld [vmem:[#allocation7 + $0x3d8] sm:$0xff]
    %v467 = vld [vmem:[#allocation7 + $0x3e0] sm:$0xff]
    %v468 = vld [vmem:[#allocation7 + $0x3e8] sm:$0xff]
    %v469 = vld [vmem:[#allocation7 + $0x3f0] sm:$0xff]
    %v470 = vld [vmem:[#allocation7 + $0x3f8] sm:$0xff]
    %v599 = vunpack.c.l.b16 %v343
    %v600 = vunpack.c.h.b16 %v343
    %v601 = vunpack.c.l.b16 %v344
    %v602 = vunpack.c.h.b16 %v344
    %v603 = vunpack.c.l.b16 %v345
    %v604 = vunpack.c.h.b16 %v345
    %v605 = vunpack.c.l.b16 %v346
    %v606 = vunpack.c.h.b16 %v346
    %v607 = vunpack.c.l.b16 %v347
    %v608 = vunpack.c.h.b16 %v347
    %v609 = vunpack.c.l.b16 %v348
    %v610 = vunpack.c.h.b16 %v348
    %v611 = vunpack.c.l.b16 %v349
    %v612 = vunpack.c.h.b16 %v349
    %v613 = vunpack.c.l.b16 %v350
    %v614 = vunpack.c.h.b16 %v350
    %v615 = vunpack.c.l.b16 %v351
    %v616 = vunpack.c.h.b16 %v351
    %v617 = vunpack.c.l.b16 %v352
    %v618 = vunpack.c.h.b16 %v352
    %v619 = vunpack.c.l.b16 %v353
    %v620 = vunpack.c.h.b16 %v353
    %v621 = vunpack.c.l.b16 %v354
    %v622 = vunpack.c.h.b16 %v354
    %v623 = vunpack.c.l.b16 %v355
    %v624 = vunpack.c.h.b16 %v355
    %v625 = vunpack.c.l.b16 %v356
    %v626 = vunpack.c.h.b16 %v356
    %v627 = vunpack.c.l.b16 %v357
    %v628 = vunpack.c.h.b16 %v357
    %v629 = vunpack.c.l.b16 %v358
    %v630 = vunpack.c.h.b16 %v358
    %v631 = vunpack.c.l.b16 %v359
    %v632 = vunpack.c.h.b16 %v359
    %v633 = vunpack.c.l.b16 %v360
    %v634 = vunpack.c.h.b16 %v360
    %v635 = vunpack.c.l.b16 %v361
    %v636 = vunpack.c.h.b16 %v361
    %v637 = vunpack.c.l.b16 %v362
    %v638 = vunpack.c.h.b16 %v362
    %v639 = vunpack.c.l.b16 %v363
    %v640 = vunpack.c.h.b16 %v363
    %v641 = vunpack.c.l.b16 %v364
    %v642 = vunpack.c.h.b16 %v364
    %v643 = vunpack.c.l.b16 %v365
    %v644 = vunpack.c.h.b16 %v365
    %v645 = vunpack.c.l.b16 %v366
    %v646 = vunpack.c.h.b16 %v366
    %v647 = vunpack.c.l.b16 %v367
    %v648 = vunpack.c.h.b16 %v367
    %v649 = vunpack.c.l.b16 %v368
    %v650 = vunpack.c.h.b16 %v368
    %v651 = vunpack.c.l.b16 %v369
    %v652 = vunpack.c.h.b16 %v369
    %v653 = vunpack.c.l.b16 %v370
    %v654 = vunpack.c.h.b16 %v370
    %v655 = vunpack.c.l.b16 %v371
    %v656 = vunpack.c.h.b16 %v371
    %v657 = vunpack.c.l.b16 %v372
    %v658 = vunpack.c.h.b16 %v372
    %v659 = vunpack.c.l.b16 %v373
    %v660 = vunpack.c.h.b16 %v373
    %v661 = vunpack.c.l.b16 %v374
    %v662 = vunpack.c.h.b16 %v374
    %v663 = vunpack.c.l.b16 %v375
    %v664 = vunpack.c.h.b16 %v375
    %v665 = vunpack.c.l.b16 %v376
    %v666 = vunpack.c.h.b16 %v376
    %v667 = vunpack.c.l.b16 %v377
    %v668 = vunpack.c.h.b16 %v377
    %v669 = vunpack.c.l.b16 %v378
    %v670 = vunpack.c.h.b16 %v378
    %v671 = vunpack.c.l.b16 %v379
    %v672 = vunpack.c.h.b16 %v379
    %v673 = vunpack.c.l.b16 %v380
    %v674 = vunpack.c.h.b16 %v380
    %v675 = vunpack.c.l.b16 %v381
    %v676 = vunpack.c.h.b16 %v381
    %v677 = vunpack.c.l.b16 %v382
    %v678 = vunpack.c.h.b16 %v382
    %v679 = vunpack.c.l.b16 %v383
    %v680 = vunpack.c.h.b16 %v383
    %v681 = vunpack.c.l.b16 %v384
    %v682 = vunpack.c.h.b16 %v384
    %v683 = vunpack.c.l.b16 %v385
    %v684 = vunpack.c.h.b16 %v385
    %v685 = vunpack.c.l.b16 %v386
    %v686 = vunpack.c.h.b16 %v386
    %v687 = vunpack.c.l.b16 %v387
    %v688 = vunpack.c.h.b16 %v387
    %v689 = vunpack.c.l.b16 %v388
    %v690 = vunpack.c.h.b16 %v388
    %v691 = vunpack.c.l.b16 %v389
    %v692 = vunpack.c.h.b16 %v389
    %v693 = vunpack.c.l.b16 %v390
    %v694 = vunpack.c.h.b16 %v390
    %v695 = vunpack.c.l.b16 %v391
    %v696 = vunpack.c.h.b16 %v391
    %v697 = vunpack.c.l.b16 %v392
    %v698 = vunpack.c.h.b16 %v392
    %v699 = vunpack.c.l.b16 %v393
    %v700 = vunpack.c.h.b16 %v393
    %v701 = vunpack.c.l.b16 %v394
    %v702 = vunpack.c.h.b16 %v394
    %v703 = vunpack.c.l.b16 %v395
    %v704 = vunpack.c.h.b16 %v395
    %v705 = vunpack.c.l.b16 %v396
    %v706 = vunpack.c.h.b16 %v396
    %v707 = vunpack.c.l.b16 %v397
    %v708 = vunpack.c.h.b16 %v397
    %v709 = vunpack.c.l.b16 %v398
    %v710 = vunpack.c.h.b16 %v398
    %v711 = vunpack.c.l.b16 %v399
    %v712 = vunpack.c.h.b16 %v399
    %v713 = vunpack.c.l.b16 %v400
    %v714 = vunpack.c.h.b16 %v400
    %v715 = vunpack.c.l.b16 %v401
    %v716 = vunpack.c.h.b16 %v401
    %v717 = vunpack.c.l.b16 %v402
    %v718 = vunpack.c.h.b16 %v402
    %v719 = vunpack.c.l.b16 %v403
    %v720 = vunpack.c.h.b16 %v403
    %v721 = vunpack.c.l.b16 %v404
    %v722 = vunpack.c.h.b16 %v404
    %v723 = vunpack.c.l.b16 %v405
    %v724 = vunpack.c.h.b16 %v405
    %v725 = vunpack.c.l.b16 %v406
    %v726 = vunpack.c.h.b16 %v406
    %v727 = vunpack.c.l.b16 %v407
    %v728 = vunpack.c.h.b16 %v407
    %v729 = vunpack.c.l.b16 %v408
    %v730 = vunpack.c.h.b16 %v408
    %v731 = vunpack.c.l.b16 %v409
    %v732 = vunpack.c.h.b16 %v409
    %v733 = vunpack.c.l.b16 %v410
    %v734 = vunpack.c.h.b16 %v410
    %v735 = vunpack.c.l.b16 %v411
    %v736 = vunpack.c.h.b16 %v411
    %v737 = vunpack.c.l.b16 %v412
    %v738 = vunpack.c.h.b16 %v412
    %v739 = vunpack.c.l.b16 %v413
    %v740 = vunpack.c.h.b16 %v413
    %v741 = vunpack.c.l.b16 %v414
    %v742 = vunpack.c.h.b16 %v414
    %v743 = vunpack.c.l.b16 %v415
    %v744 = vunpack.c.h.b16 %v415
    %v745 = vunpack.c.l.b16 %v416
    %v746 = vunpack.c.h.b16 %v416
    %v747 = vunpack.c.l.b16 %v417
    %v748 = vunpack.c.h.b16 %v417
    %v749 = vunpack.c.l.b16 %v418
    %v750 = vunpack.c.h.b16 %v418
    %v751 = vunpack.c.l.b16 %v419
    %v752 = vunpack.c.h.b16 %v419
    %v753 = vunpack.c.l.b16 %v420
    %v754 = vunpack.c.h.b16 %v420
    %v755 = vunpack.c.l.b16 %v421
    %v756 = vunpack.c.h.b16 %v421
    %v757 = vunpack.c.l.b16 %v422
    %v758 = vunpack.c.h.b16 %v422
    %v759 = vunpack.c.l.b16 %v423
    %v760 = vunpack.c.h.b16 %v423
    %v761 = vunpack.c.l.b16 %v424
    %v762 = vunpack.c.h.b16 %v424
    %v763 = vunpack.c.l.b16 %v425
    %v764 = vunpack.c.h.b16 %v425
    %v765 = vunpack.c.l.b16 %v426
    %v766 = vunpack.c.h.b16 %v426
    %v767 = vunpack.c.l.b16 %v427
    %v768 = vunpack.c.h.b16 %v427
    %v769 = vunpack.c.l.b16 %v428
    %v770 = vunpack.c.h.b16 %v428
    %v771 = vunpack.c.l.b16 %v429
    %v772 = vunpack.c.h.b16 %v429
    %v773 = vunpack.c.l.b16 %v430
    %v774 = vunpack.c.h.b16 %v430
    %v775 = vunpack.c.l.b16 %v431
    %v776 = vunpack.c.h.b16 %v431
    %v777 = vunpack.c.l.b16 %v432
    %v778 = vunpack.c.h.b16 %v432
    %v779 = vunpack.c.l.b16 %v433
    %v780 = vunpack.c.h.b16 %v433
    %v781 = vunpack.c.l.b16 %v434
    %v782 = vunpack.c.h.b16 %v434
    %v783 = vunpack.c.l.b16 %v435
    %v784 = vunpack.c.h.b16 %v435
    %v785 = vunpack.c.l.b16 %v436
    %v786 = vunpack.c.h.b16 %v436
    %v787 = vunpack.c.l.b16 %v437
    %v788 = vunpack.c.h.b16 %v437
    %v789 = vunpack.c.l.b16 %v438
    %v790 = vunpack.c.h.b16 %v438
    %v791 = vunpack.c.l.b16 %v439
    %v792 = vunpack.c.h.b16 %v439
    %v793 = vunpack.c.l.b16 %v440
    %v794 = vunpack.c.h.b16 %v440
    %v795 = vunpack.c.l.b16 %v441
    %v796 = vunpack.c.h.b16 %v441
    %v797 = vunpack.c.l.b16 %v442
    %v798 = vunpack.c.h.b16 %v442
    %v799 = vunpack.c.l.b16 %v443
    %v800 = vunpack.c.h.b16 %v443
    %v801 = vunpack.c.l.b16 %v444
    %v802 = vunpack.c.h.b16 %v444
    %v803 = vunpack.c.l.b16 %v445
    %v804 = vunpack.c.h.b16 %v445
    %v805 = vunpack.c.l.b16 %v446
    %v806 = vunpack.c.h.b16 %v446
    %v807 = vunpack.c.l.b16 %v447
    %v808 = vunpack.c.h.b16 %v447
    %v809 = vunpack.c.l.b16 %v448
    %v810 = vunpack.c.h.b16 %v448
    %v811 = vunpack.c.l.b16 %v449
    %v812 = vunpack.c.h.b16 %v449
    %v813 = vunpack.c.l.b16 %v450
    %v814 = vunpack.c.h.b16 %v450
    %v815 = vunpack.c.l.b16 %v451
    %v816 = vunpack.c.h.b16 %v451
    %v817 = vunpack.c.l.b16 %v452
    %v818 = vunpack.c.h.b16 %v452
    %v819 = vunpack.c.l.b16 %v453
    %v820 = vunpack.c.h.b16 %v453
    %v821 = vunpack.c.l.b16 %v454
    %v822 = vunpack.c.h.b16 %v454
    %v823 = vunpack.c.l.b16 %v455
    %v824 = vunpack.c.h.b16 %v455
    %v825 = vunpack.c.l.b16 %v456
    %v826 = vunpack.c.h.b16 %v456
    %v827 = vunpack.c.l.b16 %v457
    %v828 = vunpack.c.h.b16 %v457
    %v829 = vunpack.c.l.b16 %v458
    %v830 = vunpack.c.h.b16 %v458
    %v831 = vunpack.c.l.b16 %v459
    %v832 = vunpack.c.h.b16 %v459
    %v833 = vunpack.c.l.b16 %v460
    %v834 = vunpack.c.h.b16 %v460
    %v835 = vunpack.c.l.b16 %v461
    %v836 = vunpack.c.h.b16 %v461
    %v837 = vunpack.c.l.b16 %v462
    %v838 = vunpack.c.h.b16 %v462
    %v839 = vunpack.c.l.b16 %v463
    %v840 = vunpack.c.h.b16 %v463
    %v841 = vunpack.c.l.b16 %v464
    %v842 = vunpack.c.h.b16 %v464
    %v843 = vunpack.c.l.b16 %v465
    %v844 = vunpack.c.h.b16 %v465
    %v845 = vunpack.c.l.b16 %v466
    %v846 = vunpack.c.h.b16 %v466
    %v847 = vunpack.c.l.b16 %v467
    %v848 = vunpack.c.h.b16 %v467
    %v849 = vunpack.c.l.b16 %v468
    %v850 = vunpack.c.h.b16 %v468
    %v851 = vunpack.c.l.b16 %v469
    %v852 = vunpack.c.h.b16 %v469
    %v853 = vunpack.c.l.b16 %v470
    %v854 = vunpack.c.h.b16 %v470
    %v855 = vpack.c.b16 %v603, %v599
    %v856 = vpack.c.b16 %v604, %v600
    %v857 = vpack.c.b16 %v605, %v601
    %v858 = vpack.c.b16 %v606, %v602
    %v859 = vpack.c.b16 %v611, %v607
    %v860 = vpack.c.b16 %v612, %v608
    %v861 = vpack.c.b16 %v613, %v609
    %v862 = vpack.c.b16 %v614, %v610
    %v863 = vpack.c.b16 %v619, %v615
    %v864 = vpack.c.b16 %v620, %v616
    %v865 = vpack.c.b16 %v621, %v617
    %v866 = vpack.c.b16 %v622, %v618
    %v867 = vpack.c.b16 %v627, %v623
    %v868 = vpack.c.b16 %v628, %v624
    %v869 = vpack.c.b16 %v629, %v625
    %v870 = vpack.c.b16 %v630, %v626
    %v871 = vpack.c.b16 %v635, %v631
    %v872 = vpack.c.b16 %v636, %v632
    %v873 = vpack.c.b16 %v637, %v633
    %v874 = vpack.c.b16 %v638, %v634
    %v875 = vpack.c.b16 %v643, %v639
    %v876 = vpack.c.b16 %v644, %v640
    %v877 = vpack.c.b16 %v645, %v641
    %v878 = vpack.c.b16 %v646, %v642
    %v879 = vpack.c.b16 %v651, %v647
    %v880 = vpack.c.b16 %v652, %v648
    %v881 = vpack.c.b16 %v653, %v649
    %v882 = vpack.c.b16 %v654, %v650
    %v883 = vpack.c.b16 %v659, %v655
    %v884 = vpack.c.b16 %v660, %v656
    %v885 = vpack.c.b16 %v661, %v657
    %v886 = vpack.c.b16 %v662, %v658
    %v887 = vpack.c.b16 %v667, %v663
    %v888 = vpack.c.b16 %v668, %v664
    %v889 = vpack.c.b16 %v669, %v665
    %v890 = vpack.c.b16 %v670, %v666
    %v891 = vpack.c.b16 %v675, %v671
    %v892 = vpack.c.b16 %v676, %v672
    %v893 = vpack.c.b16 %v677, %v673
    %v894 = vpack.c.b16 %v678, %v674
    %v895 = vpack.c.b16 %v683, %v679
    %v896 = vpack.c.b16 %v684, %v680
    %v897 = vpack.c.b16 %v685, %v681
    %v898 = vpack.c.b16 %v686, %v682
    %v899 = vpack.c.b16 %v691, %v687
    %v900 = vpack.c.b16 %v692, %v688
    %v901 = vpack.c.b16 %v693, %v689
    %v902 = vpack.c.b16 %v694, %v690
    %v903 = vpack.c.b16 %v699, %v695
    %v904 = vpack.c.b16 %v700, %v696
    %v905 = vpack.c.b16 %v701, %v697
    %v906 = vpack.c.b16 %v702, %v698
    %v907 = vpack.c.b16 %v707, %v703
    %v908 = vpack.c.b16 %v708, %v704
    %v909 = vpack.c.b16 %v709, %v705
    %v910 = vpack.c.b16 %v710, %v706
    %v911 = vpack.c.b16 %v715, %v711
    %v912 = vpack.c.b16 %v716, %v712
    %v913 = vpack.c.b16 %v717, %v713
    %v914 = vpack.c.b16 %v718, %v714
    %v915 = vpack.c.b16 %v723, %v719
    %v916 = vpack.c.b16 %v724, %v720
    %v917 = vpack.c.b16 %v725, %v721
    %v918 = vpack.c.b16 %v726, %v722
    %v919 = vpack.c.b16 %v731, %v727
    %v920 = vpack.c.b16 %v732, %v728
    %v921 = vpack.c.b16 %v733, %v729
    %v922 = vpack.c.b16 %v734, %v730
    %v923 = vpack.c.b16 %v739, %v735
    %v924 = vpack.c.b16 %v740, %v736
    %v925 = vpack.c.b16 %v741, %v737
    %v926 = vpack.c.b16 %v742, %v738
    %v927 = vpack.c.b16 %v747, %v743
    %v928 = vpack.c.b16 %v748, %v744
    %v929 = vpack.c.b16 %v749, %v745
    %v930 = vpack.c.b16 %v750, %v746
    %v931 = vpack.c.b16 %v755, %v751
    %v932 = vpack.c.b16 %v756, %v752
    %v933 = vpack.c.b16 %v757, %v753
    %v934 = vpack.c.b16 %v758, %v754
    %v935 = vpack.c.b16 %v763, %v759
    %v936 = vpack.c.b16 %v764, %v760
    %v937 = vpack.c.b16 %v765, %v761
    %v938 = vpack.c.b16 %v766, %v762
    %v939 = vpack.c.b16 %v771, %v767
    %v940 = vpack.c.b16 %v772, %v768
    %v941 = vpack.c.b16 %v773, %v769
    %v942 = vpack.c.b16 %v774, %v770
    %v943 = vpack.c.b16 %v779, %v775
    %v944 = vpack.c.b16 %v780, %v776
    %v945 = vpack.c.b16 %v781, %v777
    %v946 = vpack.c.b16 %v782, %v778
    %v947 = vpack.c.b16 %v787, %v783
    %v948 = vpack.c.b16 %v788, %v784
    %v949 = vpack.c.b16 %v789, %v785
    %v950 = vpack.c.b16 %v790, %v786
    %v951 = vpack.c.b16 %v795, %v791
    %v952 = vpack.c.b16 %v796, %v792
    %v953 = vpack.c.b16 %v797, %v793
    %v954 = vpack.c.b16 %v798, %v794
    %v955 = vpack.c.b16 %v803, %v799
    %v956 = vpack.c.b16 %v804, %v800
    %v957 = vpack.c.b16 %v805, %v801
    %v958 = vpack.c.b16 %v806, %v802
    %v959 = vpack.c.b16 %v811, %v807
    %v960 = vpack.c.b16 %v812, %v808
    %v961 = vpack.c.b16 %v813, %v809
    %v962 = vpack.c.b16 %v814, %v810
    %v963 = vpack.c.b16 %v819, %v815
    %v964 = vpack.c.b16 %v820, %v816
    %v965 = vpack.c.b16 %v821, %v817
    %v966 = vpack.c.b16 %v822, %v818
    %v967 = vpack.c.b16 %v827, %v823
    %v968 = vpack.c.b16 %v828, %v824
    %v969 = vpack.c.b16 %v829, %v825
    %v970 = vpack.c.b16 %v830, %v826
    %v971 = vpack.c.b16 %v835, %v831
    %v972 = vpack.c.b16 %v836, %v832
    %v973 = vpack.c.b16 %v837, %v833
    %v974 = vpack.c.b16 %v838, %v834
    %v975 = vpack.c.b16 %v843, %v839
    %v976 = vpack.c.b16 %v844, %v840
    %v977 = vpack.c.b16 %v845, %v841
    %v978 = vpack.c.b16 %v846, %v842
    %v979 = vpack.c.b16 %v851, %v847
    %v980 = vpack.c.b16 %v852, %v848
    %v981 = vpack.c.b16 %v853, %v849
    %v982 = vpack.c.b16 %v854, %v850
    %1111 = vmatprep.subr.bf16.mxu0 %v856
    %1112 = vmatpush1.bf16.msra.mxu0 %v855
    %1113 = vmatprep.subr.bf16.mxu0 %v860
    %1114 = vmatpush1.bf16.msra.mxu0 %v859
    %1115 = vmatprep.subr.bf16.mxu0 %v864
    %1116 = vmatpush1.bf16.msra.mxu0 %v863
    %1117 = vmatprep.subr.bf16.mxu0 %v868
    %1118 = vmatpush1.bf16.msra.mxu0 %v867
    %1119 = vmatprep.subr.bf16.mxu0 %v872
    %1120 = vmatpush1.bf16.msra.mxu0 %v871
    %1121 = vmatprep.subr.bf16.mxu0 %v876
    %1122 = vmatpush1.bf16.msra.mxu0 %v875
    %1123 = vmatprep.subr.bf16.mxu0 %v880
    %1124 = vmatpush1.bf16.msra.mxu0 %v879
    %1125 = vmatprep.subr.bf16.mxu0 %v884
    %1126 = vmatpush1.bf16.msra.mxu0 %v883
    %1127 = vmatprep.subr.bf16.mxu0 %v888
    %1128 = vmatpush1.bf16.msra.mxu0 %v887
    %1129 = vmatprep.subr.bf16.mxu0 %v892
    %1130 = vmatpush1.bf16.msra.mxu0 %v891
    %1131 = vmatprep.subr.bf16.mxu0 %v896
    %1132 = vmatpush1.bf16.msra.mxu0 %v895
    %1133 = vmatprep.subr.bf16.mxu0 %v900
    %1134 = vmatpush1.bf16.msra.mxu0 %v899
    %1135 = vmatprep.subr.bf16.mxu0 %v904
    %1136 = vmatpush1.bf16.msra.mxu0 %v903
    %1137 = vmatprep.subr.bf16.mxu0 %v908
    %1138 = vmatpush1.bf16.msra.mxu0 %v907
    %1139 = vmatprep.subr.bf16.mxu0 %v912
    %1140 = vmatpush1.bf16.msra.mxu0 %v911
    %1141 = vmatprep.subr.bf16.mxu0 %v916
    %1142 = vmatpush1.bf16.msra.mxu0 %v915
    %1143 = vmatprep.mubr.bf16.mxu0 %v340
    %1144 = vmatmul.mubr.bf16.gmra.mrb[0].mxu0 %v339
    %v1145 = vpop.f32.mrb[0].mxu0
    %v1146 = vadd.f32 0.0, %v1145
    %v1147 = vpop.f32.mrb[0].mxu0
    %v1148 = vadd.f32 0.0, %v1147
    %v1149 = vpop.f32.mrb[0].mxu0
    %v1150 = vpop.f32.mrb[0].mxu0
    %1151 = vdwg.mxu0
    %1152 = vmatprep.subr.bf16.mxu0 %v920
    %1153 = vmatpush1.bf16.msra.mxu0 %v919
    %1154 = vmatprep.subr.bf16.mxu0 %v924
    %1155 = vmatpush1.bf16.msra.mxu0 %v923
    %1156 = vmatprep.subr.bf16.mxu0 %v928
    %1157 = vmatpush1.bf16.msra.mxu0 %v927
    %1158 = vmatprep.subr.bf16.mxu0 %v932
    %1159 = vmatpush1.bf16.msra.mxu0 %v931
    %1160 = vmatprep.subr.bf16.mxu0 %v936
    %1161 = vmatpush1.bf16.msra.mxu0 %v935
    %1162 = vmatprep.subr.bf16.mxu0 %v940
    %1163 = vmatpush1.bf16.msra.mxu0 %v939
    %1164 = vmatprep.subr.bf16.mxu0 %v944
    %1165 = vmatpush1.bf16.msra.mxu0 %v943
    %1166 = vmatprep.subr.bf16.mxu0 %v948
    %1167 = vmatpush1.bf16.msra.mxu0 %v947
    %1168 = vmatprep.subr.bf16.mxu0 %v952
    %1169 = vmatpush1.bf16.msra.mxu0 %v951
    %1170 = vmatprep.subr.bf16.mxu0 %v956
    %1171 = vmatpush1.bf16.msra.mxu0 %v955
    %1172 = vmatprep.subr.bf16.mxu0 %v960
    %1173 = vmatpush1.bf16.msra.mxu0 %v959
    %1174 = vmatprep.subr.bf16.mxu0 %v964
    %1175 = vmatpush1.bf16.msra.mxu0 %v963
    %1176 = vmatprep.subr.bf16.mxu0 %v968
    %1177 = vmatpush1.bf16.msra.mxu0 %v967
    %1178 = vmatprep.subr.bf16.mxu0 %v972
    %1179 = vmatpush1.bf16.msra.mxu0 %v971
    %1180 = vmatprep.subr.bf16.mxu0 %v976
    %1181 = vmatpush1.bf16.msra.mxu0 %v975
    %1182 = vmatprep.subr.bf16.mxu0 %v980
    %1183 = vmatpush1.bf16.msra.mxu0 %v979
    %1184 = vmatprep.mubr.bf16.mxu0 %v342
    %1185 = vmatmul.mubr.bf16.gmra.mrb[0].mxu0 %v341
    %v1186 = vpop.f32.mrb[0].mxu0
    %v1187 = vadd.f32 %v1146, %v1186
    %v1188 = vpop.f32.mrb[0].mxu0
    %v1189 = vadd.f32 %v1148, %v1188
    %v1190 = vpop.f32.mrb[0].mxu0
    %v1191 = vpop.f32.mrb[0].mxu0
    %1192 = vdwg.mxu0
    %1193 = vmatprep.subr.bf16.mxu0 %v858
    %1194 = vmatpush1.bf16.msra.mxu0 %v857
    %1195 = vmatprep.subr.bf16.mxu0 %v862
    %1196 = vmatpush1.bf16.msra.mxu0 %v861
    %1197 = vmatprep.subr.bf16.mxu0 %v866
    %1198 = vmatpush1.bf16.msra.mxu0 %v865
    %1199 = vmatprep.subr.bf16.mxu0 %v870
    %1200 = vmatpush1.bf16.msra.mxu0 %v869
    %1201 = vmatprep.subr.bf16.mxu0 %v874
    %1202 = vmatpush1.bf16.msra.mxu0 %v873
    %1203 = vmatprep.subr.bf16.mxu0 %v878
    %1204 = vmatpush1.bf16.msra.mxu0 %v877
    %1205 = vmatprep.subr.bf16.mxu0 %v882
    %1206 = vmatpush1.bf16.msra.mxu0 %v881
    %1207 = vmatprep.subr.bf16.mxu0 %v886
    %1208 = vmatpush1.bf16.msra.mxu0 %v885
    %1209 = vmatprep.subr.bf16.mxu0 %v890
    %1210 = vmatpush1.bf16.msra.mxu0 %v889
    %1211 = vmatprep.subr.bf16.mxu0 %v894
    %1212 = vmatpush1.bf16.msra.mxu0 %v893
    %1213 = vmatprep.subr.bf16.mxu0 %v898
    %1214 = vmatpush1.bf16.msra.mxu0 %v897
    %1215 = vmatprep.subr.bf16.mxu0 %v902
    %1216 = vmatpush1.bf16.msra.mxu0 %v901
    %1217 = vmatprep.subr.bf16.mxu0 %v906
    %1218 = vmatpush1.bf16.msra.mxu0 %v905
    %1219 = vmatprep.subr.bf16.mxu0 %v910
    %1220 = vmatpush1.bf16.msra.mxu0 %v909
    %1221 = vmatprep.subr.bf16.mxu0 %v914
    %1222 = vmatpush1.bf16.msra.mxu0 %v913
    %1223 = vmatprep.subr.bf16.mxu0 %v918
    %1224 = vmatpush1.bf16.msra.mxu0 %v917
    %1225 = vmatprep.mubr.bf16.mxu0 %v340
    %1226 = vmatmul.mubr.bf16.gmra.mrb[0].mxu0 %v339
    %v1227 = vpop.f32.mrb[0].mxu0
    %v1228 = vadd.f32 0.0, %v1227
    %v1229 = vpop.f32.mrb[0].mxu0
    %v1230 = vadd.f32 0.0, %v1229
    %v1231 = vpop.f32.mrb[0].mxu0
    %v1232 = vpop.f32.mrb[0].mxu0
    %1233 = vdwg.mxu0
    %1234 = vmatprep.subr.bf16.mxu0 %v922
    %1235 = vmatpush1.bf16.msra.mxu0 %v921
    %1236 = vmatprep.subr.bf16.mxu0 %v926
    %1237 = vmatpush1.bf16.msra.mxu0 %v925
    %1238 = vmatprep.subr.bf16.mxu0 %v930
    %1239 = vmatpush1.bf16.msra.mxu0 %v929
    %1240 = vmatprep.subr.bf16.mxu0 %v934
    %1241 = vmatpush1.bf16.msra.mxu0 %v933
    %1242 = vmatprep.subr.bf16.mxu0 %v938
    %1243 = vmatpush1.bf16.msra.mxu0 %v937
    %1244 = vmatprep.subr.bf16.mxu0 %v942
    %1245 = vmatpush1.bf16.msra.mxu0 %v941
    %1246 = vmatprep.subr.bf16.mxu0 %v946
    %1247 = vmatpush1.bf16.msra.mxu0 %v945
    %1248 = vmatprep.subr.bf16.mxu0 %v950
    %1249 = vmatpush1.bf16.msra.mxu0 %v949
    %1250 = vmatprep.subr.bf16.mxu0 %v954
    %1251 = vmatpush1.bf16.msra.mxu0 %v953
    %1252 = vmatprep.subr.bf16.mxu0 %v958
    %1253 = vmatpush1.bf16.msra.mxu0 %v957
    %1254 = vmatprep.subr.bf16.mxu0 %v962
    %1255 = vmatpush1.bf16.msra.mxu0 %v961
    %1256 = vmatprep.subr.bf16.mxu0 %v966
    %1257 = vmatpush1.bf16.msra.mxu0 %v965
    %1258 = vmatprep.subr.bf16.mxu0 %v970
    %1259 = vmatpush1.bf16.msra.mxu0 %v969
    %1260 = vmatprep.subr.bf16.mxu0 %v974
    %1261 = vmatpush1.bf16.msra.mxu0 %v973
    %1262 = vmatprep.subr.bf16.mxu0 %v978
    %1263 = vmatpush1.bf16.msra.mxu0 %v977
    %1264 = vmatprep.subr.bf16.mxu0 %v982
    %1265 = vmatpush1.bf16.msra.mxu0 %v981
    %1266 = vmatprep.mubr.bf16.mxu0 %v342
    %1267 = vmatmul.mubr.bf16.gmra.mrb[0].mxu0 %v341
    %v1268 = vpop.f32.mrb[0].mxu0
    %v1269 = vadd.f32 %v1228, %v1268
    %v1270 = vpop.f32.mrb[0].mxu0
    %v1271 = vadd.f32 %v1230, %v1270
    %v1272 = vpop.f32.mrb[0].mxu0
    %v1273 = vpop.f32.mrb[0].mxu0
    %1274 = vdwg.mxu0
    %v1275 = vrot.slane %v1187, 4
    %v1276 = vadd.f32 %v1187, %v1275
    %v1277 = vrot.slane %v1276, 2
    %v1278 = vadd.f32 %v1276, %v1277
    %v1279 = vrot.slane %v1278, 1
    %v1280 = vadd.f32 %v1278, %v1279
    %v1281 = vrot.slane %v1189, 4
    %v1282 = vadd.f32 %v1189, %v1281
    %v1283 = vrot.slane %v1282, 2
    %v1284 = vadd.f32 %v1282, %v1283
    %v1285 = vrot.slane %v1284, 1
    %v1286 = vadd.f32 %v1284, %v1285
    %v1287 = vrot.slane %v1269, 4
    %v1288 = vadd.f32 %v1269, %v1287
    %v1289 = vrot.slane %v1288, 2
    %v1290 = vadd.f32 %v1288, %v1289
    %v1291 = vrot.slane %v1290, 1
    %v1292 = vadd.f32 %v1290, %v1291
    %v1293 = vrot.slane %v1271, 4
    %v1294 = vadd.f32 %v1271, %v1293
    %v1295 = vrot.slane %v1294, 2
    %v1296 = vadd.f32 %v1294, %v1295
    %v1297 = vrot.slane %v1296, 1
    %v1298 = vadd.f32 %v1296, %v1297
    %v1299 = vmul.f32 %v1280, %v234
    %v1300 = vmul.f32 %v1286, %v234
    %v1301 = vmul.f32 %v1292, %v234
    %v1302 = vmul.f32 %v1298, %v234
    %v1303 = vsub.f32 %v1187, %v1299
    %v1304 = vsub.f32 %v1189, %v1300
    %v1305 = vsub.f32 %v1269, %v1301
    %v1306 = vsub.f32 %v1271, %v1302
    %v1307 = vmul.f32 %v1303, %v1303
    %v1308 = vmul.f32 %v1304, %v1304
    %v1309 = vmul.f32 %v1305, %v1305
    %v1310 = vmul.f32 %v1306, %v1306
    %v1311 = vrot.slane %v1307, 4
    %v1312 = vadd.f32 %v1307, %v1311
    %v1313 = vrot.slane %v1312, 2
    %v1314 = vadd.f32 %v1312, %v1313
    %v1315 = vrot.slane %v1314, 1
    %v1316 = vadd.f32 %v1314, %v1315
    %v1317 = vrot.slane %v1308, 4
    %v1318 = vadd.f32 %v1308, %v1317
    %v1319 = vrot.slane %v1318, 2
    %v1320 = vadd.f32 %v1318, %v1319
    %v1321 = vrot.slane %v1320, 1
    %v1322 = vadd.f32 %v1320, %v1321
    %v1323 = vrot.slane %v1309, 4
    %v1324 = vadd.f32 %v1309, %v1323
    %v1325 = vrot.slane %v1324, 2
    %v1326 = vadd.f32 %v1324, %v1325
    %v1327 = vrot.slane %v1326, 1
    %v1328 = vadd.f32 %v1326, %v1327
    %v1329 = vrot.slane %v1310, 4
    %v1330 = vadd.f32 %v1310, %v1329
    %v1331 = vrot.slane %v1330, 2
    %v1332 = vadd.f32 %v1330, %v1331
    %v1333 = vrot.slane %v1332, 1
    %v1334 = vadd.f32 %v1332, %v1333
    %v1335 = vmul.f32 %v1316, %v234
    %v1336 = vmul.f32 %v1322, %v234
    %v1337 = vmul.f32 %v1328, %v234
    %v1338 = vmul.f32 %v1334, %v234
    %v1339 = vadd.f32 %v1335, 1e-06
    %v1340 = vadd.f32 %v1336, 1e-06
    %v1341 = vadd.f32 %v1337, 1e-06
    %v1342 = vadd.f32 %v1338, 1e-06
    %v1343 = vrsqrt.pop %v1339
    %v1344 = vrsqrt.pop %v1340
    %v1345 = vrsqrt.pop %v1341
    %v1346 = vrsqrt.pop %v1342
    %v1347 = vmul.f32 %v1303, %v1343
    %v1348 = vmul.f32 %v1304, %v1344
    %v1349 = vmul.f32 %v1305, %v1345
    %v1350 = vmul.f32 %v1306, %v1346
    %vm1351 = vcmp.gt.f32.partialorder %v1347, 20.0
    %vm1352 = vcmp.gt.f32.partialorder %v1348, 20.0
    %vm1353 = vcmp.gt.f32.partialorder %v1349, 20.0
    %vm1354 = vcmp.gt.f32.partialorder %v1350, 20.0
    %v1355 = vmul.f32 %v1347, 1.442695
    %v1356 = vpow.pop %v1355
    %v1357 = vmul.f32 %v1348, 1.442695
    %v1358 = vpow.pop %v1357
    %v1359 = vmul.f32 %v1349, 1.442695
    %v1360 = vpow.pop %v1359
    %v1361 = vmul.f32 %v1350, 1.442695
    %v1362 = vpow.pop %v1361
    %v1363 = vadd.f32 %v1356, 1.0
    %v1364 = vlog2.pop %v1363
    %v1365 = vmul.f32 %v1364, 0.6931472
    %v1366 = vmul.f32 -0.5, %v1356
    %v1367 = vadd.f32 %v1366, 1.0
    %v1368 = vmul.f32 %v1367, %v1356
    %v1369 = vand.u32 2147483647, %v1356
    %vm1370 = vcmp.lt.f32.partialorder %v1369, 0.0004427343
    %v1371 = vsel %vm1370, %v1368, %v1365
    %v1372 = vadd.f32 %v1358, 1.0
    %v1373 = vlog2.pop %v1372
    %v1374 = vmul.f32 %v1373, 0.6931472
    %v1375 = vmul.f32 -0.5, %v1358
    %v1376 = vadd.f32 %v1375, 1.0
    %v1377 = vmul.f32 %v1376, %v1358
    %v1378 = vand.u32 2147483647, %v1358
    %vm1379 = vcmp.lt.f32.partialorder %v1378, 0.0004427343
    %v1380 = vsel %vm1379, %v1377, %v1374
    %v1381 = vadd.f32 %v1360, 1.0
    %v1382 = vlog2.pop %v1381
    %v1383 = vmul.f32 %v1382, 0.6931472
    %v1384 = vmul.f32 -0.5, %v1360
    %v1385 = vadd.f32 %v1384, 1.0
    %v1386 = vmul.f32 %v1385, %v1360
    %v1387 = vand.u32 2147483647, %v1360
    %vm1388 = vcmp.lt.f32.partialorder %v1387, 0.0004427343
    %v1389 = vsel %vm1388, %v1386, %v1383
    %v1390 = vadd.f32 %v1362, 1.0
    %v1391 = vlog2.pop %v1390
    %v1392 = vmul.f32 %v1391, 0.6931472
    %v1393 = vmul.f32 -0.5, %v1362
    %v1394 = vadd.f32 %v1393, 1.0
    %v1395 = vmul.f32 %v1394, %v1362
    %v1396 = vand.u32 2147483647, %v1362
    %vm1397 = vcmp.lt.f32.partialorder %v1396, 0.0004427343
    %v1398 = vsel %vm1397, %v1395, %v1392
    %v1399 = vsel %vm1351, %v1347, %v1371
    %v1400 = vsel %vm1352, %v1348, %v1380
    %v1401 = vsel %vm1353, %v1349, %v1389
    %v1402 = vsel %vm1354, %v1350, %v1398
    %v1403 = vpack.c.bf16 %v1399, %v1399
    %v1404 = vpack.c.bf16 %v1400, %v1400
    %v1405 = vpack.c.bf16 %v1401, %v1401
    %v1406 = vpack.c.bf16 %v1402, %v1402
    %v1407 = vld [vmem:[#allocation8] sm:$0xff]
    %v1408 = vld [vmem:[#allocation8 + $0x8] sm:$0xff]
    %v1409 = vld [vmem:[#allocation8 + $0x10] sm:$0xff]
    %v1410 = vld [vmem:[#allocation8 + $0x18] sm:$0xf]
    %v1411 = vld [vmem:[#allocation8 + $0x1c] sm:$0xff]
    %v1412 = vld [vmem:[#allocation8 + $0x24] sm:$0xff]
    %v1413 = vld [vmem:[#allocation8 + $0x2c] sm:$0xff]
    %v1414 = vld [vmem:[#allocation8 + $0x34] sm:$0xf]
    %v1415 = vld [vmem:[#allocation8 + $0x38] sm:$0xff]
    %v1416 = vld [vmem:[#allocation8 + $0x40] sm:$0xff]
    %v1417 = vld [vmem:[#allocation8 + $0x48] sm:$0xff]
    %v1418 = vld [vmem:[#allocation8 + $0x50] sm:$0xf]
    %v1419 = vld [vmem:[#allocation8 + $0x54] sm:$0xff]
    %v1420 = vld [vmem:[#allocation8 + $0x5c] sm:$0xff]
    %v1421 = vld [vmem:[#allocation8 + $0x64] sm:$0xff]
    %v1422 = vld [vmem:[#allocation8 + $0x6c] sm:$0xf]
    %v1423 = vld [vmem:[#allocation8 + $0x70] sm:$0xff]
    %v1424 = vld [vmem:[#allocation8 + $0x78] sm:$0xff]
    %v1425 = vld [vmem:[#allocation8 + $0x80] sm:$0xff]
    %v1426 = vld [vmem:[#allocation8 + $0x88] sm:$0xf]
    %v1427 = vld [vmem:[#allocation8 + $0x8c] sm:$0xff]
    %v1428 = vld [vmem:[#allocation8 + $0x94] sm:$0xff]
    %v1429 = vld [vmem:[#allocation8 + $0x9c] sm:$0xff]
    %v1430 = vld [vmem:[#allocation8 + $0xa4] sm:$0xf]
    %v1431 = vld [vmem:[#allocation8 + $0xa8] sm:$0xff]
    %v1432 = vld [vmem:[#allocation8 + $0xb0] sm:$0xff]
    %v1433 = vld [vmem:[#allocation8 + $0xb8] sm:$0xff]
    %v1434 = vld [vmem:[#allocation8 + $0xc0] sm:$0xf]
    %v1435 = vld [vmem:[#allocation8 + $0xc4] sm:$0xff]
    %v1436 = vld [vmem:[#allocation8 + $0xcc] sm:$0xff]
    %v1437 = vld [vmem:[#allocation8 + $0xd4] sm:$0xff]
    %v1438 = vld [vmem:[#allocation8 + $0xdc] sm:$0xf]
    %v1439 = vld [vmem:[#allocation8 + $0xe0] sm:$0xff]
    %v1440 = vld [vmem:[#allocation8 + $0xe8] sm:$0xff]
    %v1441 = vld [vmem:[#allocation8 + $0xf0] sm:$0xff]
    %v1442 = vld [vmem:[#allocation8 + $0xf8] sm:$0xf]
    %v1443 = vld [vmem:[#allocation8 + $0xfc] sm:$0xff]
    %v1444 = vld [vmem:[#allocation8 + $0x104] sm:$0xff]
    %v1445 = vld [vmem:[#allocation8 + $0x10c] sm:$0xff]
    %v1446 = vld [vmem:[#allocation8 + $0x114] sm:$0xf]
    %v1447 = vld [vmem:[#allocation8 + $0x118] sm:$0xff]
    %v1448 = vld [vmem:[#allocation8 + $0x120] sm:$0xff]
    %v1449 = vld [vmem:[#allocation8 + $0x128] sm:$0xff]
    %v1450 = vld [vmem:[#allocation8 + $0x130] sm:$0xf]
    %v1451 = vld [vmem:[#allocation8 + $0x134] sm:$0xff]
    %v1452 = vld [vmem:[#allocation8 + $0x13c] sm:$0xff]
    %v1453 = vld [vmem:[#allocation8 + $0x144] sm:$0xff]
    %v1454 = vld [vmem:[#allocation8 + $0x14c] sm:$0xf]
    %v1455 = vld [vmem:[#allocation8 + $0x150] sm:$0xff]
    %v1456 = vld [vmem:[#allocation8 + $0x158] sm:$0xff]
    %v1457 = vld [vmem:[#allocation8 + $0x160] sm:$0xff]
    %v1458 = vld [vmem:[#allocation8 + $0x168] sm:$0xf]
    %v1459 = vld [vmem:[#allocation8 + $0x16c] sm:$0xff]
    %v1460 = vld [vmem:[#allocation8 + $0x174] sm:$0xff]
    %v1461 = vld [vmem:[#allocation8 + $0x17c] sm:$0xff]
    %v1462 = vld [vmem:[#allocation8 + $0x184] sm:$0xf]
    %v1463 = vld [vmem:[#allocation8 + $0x188] sm:$0xff]
    %v1464 = vld [vmem:[#allocation8 + $0x190] sm:$0xff]
    %v1465 = vld [vmem:[#allocation8 + $0x198] sm:$0xff]
    %v1466 = vld [vmem:[#allocation8 + $0x1a0] sm:$0xf]
    %v1467 = vld [vmem:[#allocation8 + $0x1a4] sm:$0xff]
    %v1468 = vld [vmem:[#allocation8 + $0x1ac] sm:$0xff]
    %v1469 = vld [vmem:[#allocation8 + $0x1b4] sm:$0xff]
    %v1470 = vld [vmem:[#allocation8 + $0x1bc] sm:$0xf]
    %v1471 = vld [vmem:[#allocation8 + $0x1c0] sm:$0xff]
    %v1472 = vld [vmem:[#allocation8 + $0x1c8] sm:$0xff]
    %v1473 = vld [vmem:[#allocation8 + $0x1d0] sm:$0xff]
    %v1474 = vld [vmem:[#allocation8 + $0x1d8] sm:$0xf]
    %v1475 = vld [vmem:[#allocation8 + $0x1dc] sm:$0xff]
    %v1476 = vld [vmem:[#allocation8 + $0x1e4] sm:$0xff]
    %v1477 = vld [vmem:[#allocation8 + $0x1ec] sm:$0xff]
    %v1478 = vld [vmem:[#allocation8 + $0x1f4] sm:$0xf]
    %v1479 = vld [vmem:[#allocation8 + $0x1f8] sm:$0xff]
    %v1480 = vld [vmem:[#allocation8 + $0x200] sm:$0xff]
    %v1481 = vld [vmem:[#allocation8 + $0x208] sm:$0xff]
    %v1482 = vld [vmem:[#allocation8 + $0x210] sm:$0xf]
    %v1483 = vld [vmem:[#allocation8 + $0x214] sm:$0xff]
    %v1484 = vld [vmem:[#allocation8 + $0x21c] sm:$0xff]
    %v1485 = vld [vmem:[#allocation8 + $0x224] sm:$0xff]
    %v1486 = vld [vmem:[#allocation8 + $0x22c] sm:$0xf]
    %v1487 = vld [vmem:[#allocation8 + $0x230] sm:$0xff]
    %v1488 = vld [vmem:[#allocation8 + $0x238] sm:$0xff]
    %v1489 = vld [vmem:[#allocation8 + $0x240] sm:$0xff]
    %v1490 = vld [vmem:[#allocation8 + $0x248] sm:$0xf]
    %v1491 = vld [vmem:[#allocation8 + $0x24c] sm:$0xff]
    %v1492 = vld [vmem:[#allocation8 + $0x254] sm:$0xff]
    %v1493 = vld [vmem:[#allocation8 + $0x25c] sm:$0xff]
    %v1494 = vld [vmem:[#allocation8 + $0x264] sm:$0xf]
    %v1495 = vld [vmem:[#allocation8 + $0x268] sm:$0xff]
    %v1496 = vld [vmem:[#allocation8 + $0x270] sm:$0xff]
    %v1497 = vld [vmem:[#allocation8 + $0x278] sm:$0xff]
    %v1498 = vld [vmem:[#allocation8 + $0x280] sm:$0xf]
    %v1499 = vld [vmem:[#allocation8 + $0x284] sm:$0xff]
    %v1500 = vld [vmem:[#allocation8 + $0x28c] sm:$0xff]
    %v1501 = vld [vmem:[#allocation8 + $0x294] sm:$0xff]
    %v1502 = vld [vmem:[#allocation8 + $0x29c] sm:$0xf]
    %v1503 = vld [vmem:[#allocation8 + $0x2a0] sm:$0xff]
    %v1504 = vld [vmem:[#allocation8 + $0x2a8] sm:$0xff]
    %v1505 = vld [vmem:[#allocation8 + $0x2b0] sm:$0xff]
    %v1506 = vld [vmem:[#allocation8 + $0x2b8] sm:$0xf]
    %v1507 = vld [vmem:[#allocation8 + $0x2bc] sm:$0xff]
    %v1508 = vld [vmem:[#allocation8 + $0x2c4] sm:$0xff]
    %v1509 = vld [vmem:[#allocation8 + $0x2cc] sm:$0xff]
    %v1510 = vld [vmem:[#allocation8 + $0x2d4] sm:$0xf]
    %v1511 = vld [vmem:[#allocation8 + $0x2d8] sm:$0xff]
    %v1512 = vld [vmem:[#allocation8 + $0x2e0] sm:$0xff]
    %v1513 = vld [vmem:[#allocation8 + $0x2e8] sm:$0xff]
    %v1514 = vld [vmem:[#allocation8 + $0x2f0] sm:$0xf]
    %v1515 = vld [vmem:[#allocation8 + $0x2f4] sm:$0xff]
    %v1516 = vld [vmem:[#allocation8 + $0x2fc] sm:$0xff]
    %v1517 = vld [vmem:[#allocation8 + $0x304] sm:$0xff]
    %v1518 = vld [vmem:[#allocation8 + $0x30c] sm:$0xf]
    %v1519 = vld [vmem:[#allocation8 + $0x310] sm:$0xff]
    %v1520 = vld [vmem:[#allocation8 + $0x318] sm:$0xff]
    %v1521 = vld [vmem:[#allocation8 + $0x320] sm:$0xff]
    %v1522 = vld [vmem:[#allocation8 + $0x328] sm:$0xf]
    %v1523 = vld [vmem:[#allocation8 + $0x32c] sm:$0xff]
    %v1524 = vld [vmem:[#allocation8 + $0x334] sm:$0xff]
    %v1525 = vld [vmem:[#allocation8 + $0x33c] sm:$0xff]
    %v1526 = vld [vmem:[#allocation8 + $0x344] sm:$0xf]
    %v1527 = vld [vmem:[#allocation8 + $0x348] sm:$0xff]
    %v1528 = vld [vmem:[#allocation8 + $0x350] sm:$0xff]
    %v1529 = vld [vmem:[#allocation8 + $0x358] sm:$0xff]
    %v1530 = vld [vmem:[#allocation8 + $0x360] sm:$0xf]
    %v1531 = vld [vmem:[#allocation8 + $0x364] sm:$0xff]
    %v1532 = vld [vmem:[#allocation8 + $0x36c] sm:$0xff]
    %v1533 = vld [vmem:[#allocation8 + $0x374] sm:$0xff]
    %v1534 = vld [vmem:[#allocation8 + $0x37c] sm:$0xf]
    %v1535 = vld [vmem:[#allocation8 + $0x380] sm:$0xff]
    %v1536 = vld [vmem:[#allocation8 + $0x388] sm:$0xff]
    %v1537 = vld [vmem:[#allocation8 + $0x390] sm:$0xff]
    %v1538 = vld [vmem:[#allocation8 + $0x398] sm:$0xf]
    %v1539 = vld [vmem:[#allocation8 + $0x39c] sm:$0xff]
    %v1540 = vld [vmem:[#allocation8 + $0x3a4] sm:$0xff]
    %v1541 = vld [vmem:[#allocation8 + $0x3ac] sm:$0xff]
    %v1542 = vld [vmem:[#allocation8 + $0x3b4] sm:$0xf]
    %v1543 = vld [vmem:[#allocation8 + $0x3b8] sm:$0xff]
    %v1544 = vld [vmem:[#allocation8 + $0x3c0] sm:$0xff]
    %v1545 = vld [vmem:[#allocation8 + $0x3c8] sm:$0xff]
    %v1546 = vld [vmem:[#allocation8 + $0x3d0] sm:$0xf]
    %v1547 = vld [vmem:[#allocation8 + $0x3d4] sm:$0xff]
    %v1548 = vld [vmem:[#allocation8 + $0x3dc] sm:$0xff]
    %v1549 = vld [vmem:[#allocation8 + $0x3e4] sm:$0xff]
    %v1550 = vld [vmem:[#allocation8 + $0x3ec] sm:$0xf]
    %v1551 = vld [vmem:[#allocation8 + $0x3f0] sm:$0xff]
    %v1552 = vld [vmem:[#allocation8 + $0x3f8] sm:$0xff]
    %v1553 = vld [vmem:[#allocation8 + $0x400] sm:$0xff]
    %v1554 = vld [vmem:[#allocation8 + $0x408] sm:$0xf]
    %v1555 = vld [vmem:[#allocation8 + $0x40c] sm:$0xff]
    %v1556 = vld [vmem:[#allocation8 + $0x414] sm:$0xff]
    %v1557 = vld [vmem:[#allocation8 + $0x41c] sm:$0xff]
    %v1558 = vld [vmem:[#allocation8 + $0x424] sm:$0xf]
    %v1559 = vld [vmem:[#allocation8 + $0x428] sm:$0xff]
    %v1560 = vld [vmem:[#allocation8 + $0x430] sm:$0xff]
    %v1561 = vld [vmem:[#allocation8 + $0x438] sm:$0xff]
    %v1562 = vld [vmem:[#allocation8 + $0x440] sm:$0xf]
    %v1563 = vld [vmem:[#allocation8 + $0x444] sm:$0xff]
    %v1564 = vld [vmem:[#allocation8 + $0x44c] sm:$0xff]
    %v1565 = vld [vmem:[#allocation8 + $0x454] sm:$0xff]
    %v1566 = vld [vmem:[#allocation8 + $0x45c] sm:$0xf]
    %v1567 = vld [vmem:[#allocation8 + $0x460] sm:$0xff]
    %v1568 = vld [vmem:[#allocation8 + $0x468] sm:$0xff]
    %v1569 = vld [vmem:[#allocation8 + $0x470] sm:$0xff]
    %v1570 = vld [vmem:[#allocation8 + $0x478] sm:$0xf]
    %v1571 = vld [vmem:[#allocation8 + $0x47c] sm:$0xff]
    %v1572 = vld [vmem:[#allocation8 + $0x484] sm:$0xff]
    %v1573 = vld [vmem:[#allocation8 + $0x48c] sm:$0xff]
    %v1574 = vld [vmem:[#allocation8 + $0x494] sm:$0xf]
    %v1575 = vld [vmem:[#allocation8 + $0x498] sm:$0xff]
    %v1576 = vld [vmem:[#allocation8 + $0x4a0] sm:$0xff]
    %v1577 = vld [vmem:[#allocation8 + $0x4a8] sm:$0xff]
    %v1578 = vld [vmem:[#allocation8 + $0x4b0] sm:$0xf]
    %v1579 = vld [vmem:[#allocation8 + $0x4b4] sm:$0xff]
    %v1580 = vld [vmem:[#allocation8 + $0x4bc] sm:$0xff]
    %v1581 = vld [vmem:[#allocation8 + $0x4c4] sm:$0xff]
    %v1582 = vld [vmem:[#allocation8 + $0x4cc] sm:$0xf]
    %v1583 = vld [vmem:[#allocation8 + $0x4d0] sm:$0xff]
    %v1584 = vld [vmem:[#allocation8 + $0x4d8] sm:$0xff]
    %v1585 = vld [vmem:[#allocation8 + $0x4e0] sm:$0xff]
    %v1586 = vld [vmem:[#allocation8 + $0x4e8] sm:$0xf]
    %v1587 = vld [vmem:[#allocation8 + $0x4ec] sm:$0xff]
    %v1588 = vld [vmem:[#allocation8 + $0x4f4] sm:$0xff]
    %v1589 = vld [vmem:[#allocation8 + $0x4fc] sm:$0xff]
    %v1590 = vld [vmem:[#allocation8 + $0x504] sm:$0xf]
    %v1591 = vld [vmem:[#allocation8 + $0x508] sm:$0xff]
    %v1592 = vld [vmem:[#allocation8 + $0x510] sm:$0xff]
    %v1593 = vld [vmem:[#allocation8 + $0x518] sm:$0xff]
    %v1594 = vld [vmem:[#allocation8 + $0x520] sm:$0xf]
    %v1595 = vld [vmem:[#allocation8 + $0x524] sm:$0xff]
    %v1596 = vld [vmem:[#allocation8 + $0x52c] sm:$0xff]
    %v1597 = vld [vmem:[#allocation8 + $0x534] sm:$0xff]
    %v1598 = vld [vmem:[#allocation8 + $0x53c] sm:$0xf]
    %v1599 = vld [vmem:[#allocation8 + $0x540] sm:$0xff]
    %v1600 = vld [vmem:[#allocation8 + $0x548] sm:$0xff]
    %v1601 = vld [vmem:[#allocation8 + $0x550] sm:$0xff]
    %v1602 = vld [vmem:[#allocation8 + $0x558] sm:$0xf]
    %v1603 = vld [vmem:[#allocation8 + $0x55c] sm:$0xff]
    %v1604 = vld [vmem:[#allocation8 + $0x564] sm:$0xff]
    %v1605 = vld [vmem:[#allocation8 + $0x56c] sm:$0xff]
    %v1606 = vld [vmem:[#allocation8 + $0x574] sm:$0xf]
    %v1607 = vld [vmem:[#allocation8 + $0x578] sm:$0xff]
    %v1608 = vld [vmem:[#allocation8 + $0x580] sm:$0xff]
    %v1609 = vld [vmem:[#allocation8 + $0x588] sm:$0xff]
    %v1610 = vld [vmem:[#allocation8 + $0x590] sm:$0xf]
    %v1611 = vld [vmem:[#allocation8 + $0x594] sm:$0xff]
    %v1612 = vld [vmem:[#allocation8 + $0x59c] sm:$0xff]
    %v1613 = vld [vmem:[#allocation8 + $0x5a4] sm:$0xff]
    %v1614 = vld [vmem:[#allocation8 + $0x5ac] sm:$0xf]
    %v1615 = vld [vmem:[#allocation8 + $0x5b0] sm:$0xff]
    %v1616 = vld [vmem:[#allocation8 + $0x5b8] sm:$0xff]
    %v1617 = vld [vmem:[#allocation8 + $0x5c0] sm:$0xff]
    %v1618 = vld [vmem:[#allocation8 + $0x5c8] sm:$0xf]
    %v1619 = vld [vmem:[#allocation8 + $0x5cc] sm:$0xff]
    %v1620 = vld [vmem:[#allocation8 + $0x5d4] sm:$0xff]
    %v1621 = vld [vmem:[#allocation8 + $0x5dc] sm:$0xff]
    %v1622 = vld [vmem:[#allocation8 + $0x5e4] sm:$0xf]
    %v1623 = vld [vmem:[#allocation8 + $0x5e8] sm:$0xff]
    %v1624 = vld [vmem:[#allocation8 + $0x5f0] sm:$0xff]
    %v1625 = vld [vmem:[#allocation8 + $0x5f8] sm:$0xff]
    %v1626 = vld [vmem:[#allocation8 + $0x600] sm:$0xf]
    %v1627 = vld [vmem:[#allocation8 + $0x604] sm:$0xff]
    %v1628 = vld [vmem:[#allocation8 + $0x60c] sm:$0xff]
    %v1629 = vld [vmem:[#allocation8 + $0x614] sm:$0xff]
    %v1630 = vld [vmem:[#allocation8 + $0x61c] sm:$0xf]
    %v1631 = vld [vmem:[#allocation8 + $0x620] sm:$0xff]
    %v1632 = vld [vmem:[#allocation8 + $0x628] sm:$0xff]
    %v1633 = vld [vmem:[#allocation8 + $0x630] sm:$0xff]
    %v1634 = vld [vmem:[#allocation8 + $0x638] sm:$0xf]
    %v1635 = vld [vmem:[#allocation8 + $0x63c] sm:$0xff]
    %v1636 = vld [vmem:[#allocation8 + $0x644] sm:$0xff]
    %v1637 = vld [vmem:[#allocation8 + $0x64c] sm:$0xff]
    %v1638 = vld [vmem:[#allocation8 + $0x654] sm:$0xf]
    %v1639 = vld [vmem:[#allocation8 + $0x658] sm:$0xff]
    %v1640 = vld [vmem:[#allocation8 + $0x660] sm:$0xff]
    %v1641 = vld [vmem:[#allocation8 + $0x668] sm:$0xff]
    %v1642 = vld [vmem:[#allocation8 + $0x670] sm:$0xf]
    %v1643 = vld [vmem:[#allocation8 + $0x674] sm:$0xff]
    %v1644 = vld [vmem:[#allocation8 + $0x67c] sm:$0xff]
    %v1645 = vld [vmem:[#allocation8 + $0x684] sm:$0xff]
    %v1646 = vld [vmem:[#allocation8 + $0x68c] sm:$0xf]
    %v1647 = vld [vmem:[#allocation8 + $0x690] sm:$0xff]
    %v1648 = vld [vmem:[#allocation8 + $0x698] sm:$0xff]
    %v1649 = vld [vmem:[#allocation8 + $0x6a0] sm:$0xff]
    %v1650 = vld [vmem:[#allocation8 + $0x6a8] sm:$0xf]
    %v1651 = vld [vmem:[#allocation8 + $0x6ac] sm:$0xff]
    %v1652 = vld [vmem:[#allocation8 + $0x6b4] sm:$0xff]
    %v1653 = vld [vmem:[#allocation8 + $0x6bc] sm:$0xff]
    %v1654 = vld [vmem:[#allocation8 + $0x6c4] sm:$0xf]
    %v1655 = vld [vmem:[#allocation8 + $0x6c8] sm:$0xff]
    %v1656 = vld [vmem:[#allocation8 + $0x6d0] sm:$0xff]
    %v1657 = vld [vmem:[#allocation8 + $0x6d8] sm:$0xff]
    %v1658 = vld [vmem:[#allocation8 + $0x6e0] sm:$0xf]
    %v1659 = vld [vmem:[#allocation8 + $0x6e4] sm:$0xff]
    %v1660 = vld [vmem:[#allocation8 + $0x6ec] sm:$0xff]
    %v1661 = vld [vmem:[#allocation8 + $0x6f4] sm:$0xff]
    %v1662 = vld [vmem:[#allocation8 + $0x6fc] sm:$0xf]
    %v1663 = vld [vmem:[%s4] sm:$0xff]
    %v1665 = vlaneseq
    %v1666 = vshrl.u32 %v1665, 7
    %v1667 = vsub.s32 0, %v1666
    %v1668 = vrot.slane %v1663, %v1667
    %v1669 = vlaneseq
    %v1670 = vshrl.u32 %v1669, 7
    %v1671 = vsub.s32 1, %v1670
    %v1672 = vrot.slane %v1663, %v1671
    %v1673 = vlaneseq
    %v1674 = vshrl.u32 %v1673, 7
    %v1675 = vsub.s32 2, %v1674
    %v1676 = vrot.slane %v1663, %v1675
    %v1677 = vlaneseq
    %v1678 = vshrl.u32 %v1677, 7
    %v1679 = vsub.s32 3, %v1678
    %v1680 = vrot.slane %v1663, %v1679
    %v1681 = vlaneseq
    %v1682 = vshrl.u32 %v1681, 7
    %v1683 = vsub.s32 4, %v1682
    %v1684 = vrot.slane %v1663, %v1683
    %v1685 = vlaneseq
    %v1686 = vshrl.u32 %v1685, 7
    %v1687 = vsub.s32 5, %v1686
    %v1688 = vrot.slane %v1663, %v1687
    %v1689 = vlaneseq
    %v1690 = vshrl.u32 %v1689, 7
    %v1691 = vsub.s32 6, %v1690
    %v1692 = vrot.slane %v1663, %v1691
    %v1956 = vunpack.c.l.b16 %v1407
    %v1957 = vunpack.c.h.b16 %v1407
    %v1958 = vunpack.c.l.b16 %v1408
    %v1959 = vunpack.c.h.b16 %v1408
    %v1960 = vunpack.c.l.b16 %v1409
    %v1961 = vunpack.c.h.b16 %v1409
    %v1962 = vunpack.c.l.b16 %v1410
    %v1963 = vunpack.c.l.b16 %v1411
    %v1964 = vunpack.c.h.b16 %v1411
    %v1965 = vunpack.c.l.b16 %v1412
    %v1966 = vunpack.c.h.b16 %v1412
    %v1967 = vunpack.c.l.b16 %v1413
    %v1968 = vunpack.c.h.b16 %v1413
    %v1969 = vunpack.c.l.b16 %v1414
    %v1970 = vunpack.c.l.b16 %v1415
    %v1971 = vunpack.c.h.b16 %v1415
    %v1972 = vunpack.c.l.b16 %v1416
    %v1973 = vunpack.c.h.b16 %v1416
    %v1974 = vunpack.c.l.b16 %v1417
    %v1975 = vunpack.c.h.b16 %v1417
    %v1976 = vunpack.c.l.b16 %v1418
    %v1977 = vunpack.c.l.b16 %v1419
    %v1978 = vunpack.c.h.b16 %v1419
    %v1979 = vunpack.c.l.b16 %v1420
    %v1980 = vunpack.c.h.b16 %v1420
    %v1981 = vunpack.c.l.b16 %v1421
    %v1982 = vunpack.c.h.b16 %v1421
    %v1983 = vunpack.c.l.b16 %v1422
    %v1984 = vunpack.c.l.b16 %v1423
    %v1985 = vunpack.c.h.b16 %v1423
    %v1986 = vunpack.c.l.b16 %v1424
    %v1987 = vunpack.c.h.b16 %v1424
    %v1988 = vunpack.c.l.b16 %v1425
    %v1989 = vunpack.c.h.b16 %v1425
    %v1990 = vunpack.c.l.b16 %v1426
    %v1991 = vunpack.c.l.b16 %v1427
    %v1992 = vunpack.c.h.b16 %v1427
    %v1993 = vunpack.c.l.b16 %v1428
    %v1994 = vunpack.c.h.b16 %v1428
    %v1995 = vunpack.c.l.b16 %v1429
    %v1996 = vunpack.c.h.b16 %v1429
    %v1997 = vunpack.c.l.b16 %v1430
    %v1998 = vunpack.c.l.b16 %v1431
    %v1999 = vunpack.c.h.b16 %v1431
    %v2000 = vunpack.c.l.b16 %v1432
    %v2001 = vunpack.c.h.b16 %v1432
    %v2002 = vunpack.c.l.b16 %v1433
    %v2003 = vunpack.c.h.b16 %v1433
    %v2004 = vunpack.c.l.b16 %v1434
    %v2005 = vunpack.c.l.b16 %v1435
    %v2006 = vunpack.c.h.b16 %v1435
    %v2007 = vunpack.c.l.b16 %v1436
    %v2008 = vunpack.c.h.b16 %v1436
    %v2009 = vunpack.c.l.b16 %v1437
    %v2010 = vunpack.c.h.b16 %v1437
    %v2011 = vunpack.c.l.b16 %v1438
    %v2012 = vunpack.c.l.b16 %v1439
    %v2013 = vunpack.c.h.b16 %v1439
    %v2014 = vunpack.c.l.b16 %v1440
    %v2015 = vunpack.c.h.b16 %v1440
    %v2016 = vunpack.c.l.b16 %v1441
    %v2017 = vunpack.c.h.b16 %v1441
    %v2018 = vunpack.c.l.b16 %v1442
    %v2019 = vunpack.c.l.b16 %v1443
    %v2020 = vunpack.c.h.b16 %v1443
    %v2021 = vunpack.c.l.b16 %v1444
    %v2022 = vunpack.c.h.b16 %v1444
    %v2023 = vunpack.c.l.b16 %v1445
    %v2024 = vunpack.c.h.b16 %v1445
    %v2025 = vunpack.c.l.b16 %v1446
    %v2026 = vunpack.c.l.b16 %v1447
    %v2027 = vunpack.c.h.b16 %v1447
    %v2028 = vunpack.c.l.b16 %v1448
    %v2029 = vunpack.c.h.b16 %v1448
    %v2030 = vunpack.c.l.b16 %v1449
    %v2031 = vunpack.c.h.b16 %v1449
    %v2032 = vunpack.c.l.b16 %v1450
    %v2033 = vunpack.c.l.b16 %v1451
    %v2034 = vunpack.c.h.b16 %v1451
    %v2035 = vunpack.c.l.b16 %v1452
    %v2036 = vunpack.c.h.b16 %v1452
    %v2037 = vunpack.c.l.b16 %v1453
    %v2038 = vunpack.c.h.b16 %v1453
    %v2039 = vunpack.c.l.b16 %v1454
    %v2040 = vunpack.c.l.b16 %v1455
    %v2041 = vunpack.c.h.b16 %v1455
    %v2042 = vunpack.c.l.b16 %v1456
    %v2043 = vunpack.c.h.b16 %v1456
    %v2044 = vunpack.c.l.b16 %v1457
    %v2045 = vunpack.c.h.b16 %v1457
    %v2046 = vunpack.c.l.b16 %v1458
    %v2047 = vunpack.c.l.b16 %v1459
    %v2048 = vunpack.c.h.b16 %v1459
    %v2049 = vunpack.c.l.b16 %v1460
    %v2050 = vunpack.c.h.b16 %v1460
    %v2051 = vunpack.c.l.b16 %v1461
    %v2052 = vunpack.c.h.b16 %v1461
    %v2053 = vunpack.c.l.b16 %v1462
    %v2054 = vunpack.c.l.b16 %v1463
    %v2055 = vunpack.c.h.b16 %v1463
    %v2056 = vunpack.c.l.b16 %v1464
    %v2057 = vunpack.c.h.b16 %v1464
    %v2058 = vunpack.c.l.b16 %v1465
    %v2059 = vunpack.c.h.b16 %v1465
    %v2060 = vunpack.c.l.b16 %v1466
    %v2061 = vunpack.c.l.b16 %v1467
    %v2062 = vunpack.c.h.b16 %v1467
    %v2063 = vunpack.c.l.b16 %v1468
    %v2064 = vunpack.c.h.b16 %v1468
    %v2065 = vunpack.c.l.b16 %v1469
    %v2066 = vunpack.c.h.b16 %v1469
    %v2067 = vunpack.c.l.b16 %v1470
    %v2068 = vunpack.c.l.b16 %v1471
    %v2069 = vunpack.c.h.b16 %v1471
    %v2070 = vunpack.c.l.b16 %v1472
    %v2071 = vunpack.c.h.b16 %v1472
    %v2072 = vunpack.c.l.b16 %v1473
    %v2073 = vunpack.c.h.b16 %v1473
    %v2074 = vunpack.c.l.b16 %v1474
    %v2075 = vunpack.c.l.b16 %v1475
    %v2076 = vunpack.c.h.b16 %v1475
    %v2077 = vunpack.c.l.b16 %v1476
    %v2078 = vunpack.c.h.b16 %v1476
    %v2079 = vunpack.c.l.b16 %v1477
    %v2080 = vunpack.c.h.b16 %v1477
    %v2081 = vunpack.c.l.b16 %v1478
    %v2082 = vunpack.c.l.b16 %v1479
    %v2083 = vunpack.c.h.b16 %v1479
    %v2084 = vunpack.c.l.b16 %v1480
    %v2085 = vunpack.c.h.b16 %v1480
    %v2086 = vunpack.c.l.b16 %v1481
    %v2087 = vunpack.c.h.b16 %v1481
    %v2088 = vunpack.c.l.b16 %v1482
    %v2089 = vunpack.c.l.b16 %v1483
    %v2090 = vunpack.c.h.b16 %v1483
    %v2091 = vunpack.c.l.b16 %v1484
    %v2092 = vunpack.c.h.b16 %v1484
    %v2093 = vunpack.c.l.b16 %v1485
    %v2094 = vunpack.c.h.b16 %v1485
    %v2095 = vunpack.c.l.b16 %v1486
    %v2096 = vunpack.c.l.b16 %v1487
    %v2097 = vunpack.c.h.b16 %v1487
    %v2098 = vunpack.c.l.b16 %v1488
    %v2099 = vunpack.c.h.b16 %v1488
    %v2100 = vunpack.c.l.b16 %v1489
    %v2101 = vunpack.c.h.b16 %v1489
    %v2102 = vunpack.c.l.b16 %v1490
    %v2103 = vunpack.c.l.b16 %v1491
    %v2104 = vunpack.c.h.b16 %v1491
    %v2105 = vunpack.c.l.b16 %v1492
    %v2106 = vunpack.c.h.b16 %v1492
    %v2107 = vunpack.c.l.b16 %v1493
    %v2108 = vunpack.c.h.b16 %v1493
    %v2109 = vunpack.c.l.b16 %v1494
    %v2110 = vunpack.c.l.b16 %v1495
    %v2111 = vunpack.c.h.b16 %v1495
    %v2112 = vunpack.c.l.b16 %v1496
    %v2113 = vunpack.c.h.b16 %v1496
    %v2114 = vunpack.c.l.b16 %v1497
    %v2115 = vunpack.c.h.b16 %v1497
    %v2116 = vunpack.c.l.b16 %v1498
    %v2117 = vunpack.c.l.b16 %v1499
    %v2118 = vunpack.c.h.b16 %v1499
    %v2119 = vunpack.c.l.b16 %v1500
    %v2120 = vunpack.c.h.b16 %v1500
    %v2121 = vunpack.c.l.b16 %v1501
    %v2122 = vunpack.c.h.b16 %v1501
    %v2123 = vunpack.c.l.b16 %v1502
    %v2124 = vunpack.c.l.b16 %v1503
    %v2125 = vunpack.c.h.b16 %v1503
    %v2126 = vunpack.c.l.b16 %v1504
    %v2127 = vunpack.c.h.b16 %v1504
    %v2128 = vunpack.c.l.b16 %v1505
    %v2129 = vunpack.c.h.b16 %v1505
    %v2130 = vunpack.c.l.b16 %v1506
    %v2131 = vunpack.c.l.b16 %v1507
    %v2132 = vunpack.c.h.b16 %v1507
    %v2133 = vunpack.c.l.b16 %v1508
    %v2134 = vunpack.c.h.b16 %v1508
    %v2135 = vunpack.c.l.b16 %v1509
    %v2136 = vunpack.c.h.b16 %v1509
    %v2137 = vunpack.c.l.b16 %v1510
    %v2138 = vunpack.c.l.b16 %v1511
    %v2139 = vunpack.c.h.b16 %v1511
    %v2140 = vunpack.c.l.b16 %v1512
    %v2141 = vunpack.c.h.b16 %v1512
    %v2142 = vunpack.c.l.b16 %v1513
    %v2143 = vunpack.c.h.b16 %v1513
    %v2144 = vunpack.c.l.b16 %v1514
    %v2145 = vunpack.c.l.b16 %v1515
    %v2146 = vunpack.c.h.b16 %v1515
    %v2147 = vunpack.c.l.b16 %v1516
    %v2148 = vunpack.c.h.b16 %v1516
    %v2149 = vunpack.c.l.b16 %v1517
    %v2150 = vunpack.c.h.b16 %v1517
    %v2151 = vunpack.c.l.b16 %v1518
    %v2152 = vunpack.c.l.b16 %v1519
    %v2153 = vunpack.c.h.b16 %v1519
    %v2154 = vunpack.c.l.b16 %v1520
    %v2155 = vunpack.c.h.b16 %v1520
    %v2156 = vunpack.c.l.b16 %v1521
    %v2157 = vunpack.c.h.b16 %v1521
    %v2158 = vunpack.c.l.b16 %v1522
    %v2159 = vunpack.c.l.b16 %v1523
    %v2160 = vunpack.c.h.b16 %v1523
    %v2161 = vunpack.c.l.b16 %v1524
    %v2162 = vunpack.c.h.b16 %v1524
    %v2163 = vunpack.c.l.b16 %v1525
    %v2164 = vunpack.c.h.b16 %v1525
    %v2165 = vunpack.c.l.b16 %v1526
    %v2166 = vunpack.c.l.b16 %v1527
    %v2167 = vunpack.c.h.b16 %v1527
    %v2168 = vunpack.c.l.b16 %v1528
    %v2169 = vunpack.c.h.b16 %v1528
    %v2170 = vunpack.c.l.b16 %v1529
    %v2171 = vunpack.c.h.b16 %v1529
    %v2172 = vunpack.c.l.b16 %v1530
    %v2173 = vunpack.c.l.b16 %v1531
    %v2174 = vunpack.c.h.b16 %v1531
    %v2175 = vunpack.c.l.b16 %v1532
    %v2176 = vunpack.c.h.b16 %v1532
    %v2177 = vunpack.c.l.b16 %v1533
    %v2178 = vunpack.c.h.b16 %v1533
    %v2179 = vunpack.c.l.b16 %v1534
    %v2180 = vunpack.c.l.b16 %v1535
    %v2181 = vunpack.c.h.b16 %v1535
    %v2182 = vunpack.c.l.b16 %v1536
    %v2183 = vunpack.c.h.b16 %v1536
    %v2184 = vunpack.c.l.b16 %v1537
    %v2185 = vunpack.c.h.b16 %v1537
    %v2186 = vunpack.c.l.b16 %v1538
    %v2187 = vunpack.c.l.b16 %v1539
    %v2188 = vunpack.c.h.b16 %v1539
    %v2189 = vunpack.c.l.b16 %v1540
    %v2190 = vunpack.c.h.b16 %v1540
    %v2191 = vunpack.c.l.b16 %v1541
    %v2192 = vunpack.c.h.b16 %v1541
    %v2193 = vunpack.c.l.b16 %v1542
    %v2194 = vunpack.c.l.b16 %v1543
    %v2195 = vunpack.c.h.b16 %v1543
    %v2196 = vunpack.c.l.b16 %v1544
    %v2197 = vunpack.c.h.b16 %v1544
    %v2198 = vunpack.c.l.b16 %v1545
    %v2199 = vunpack.c.h.b16 %v1545
    %v2200 = vunpack.c.l.b16 %v1546
    %v2201 = vunpack.c.l.b16 %v1547
    %v2202 = vunpack.c.h.b16 %v1547
    %v2203 = vunpack.c.l.b16 %v1548
    %v2204 = vunpack.c.h.b16 %v1548
    %v2205 = vunpack.c.l.b16 %v1549
    %v2206 = vunpack.c.h.b16 %v1549
    %v2207 = vunpack.c.l.b16 %v1550
    %v2208 = vunpack.c.l.b16 %v1551
    %v2209 = vunpack.c.h.b16 %v1551
    %v2210 = vunpack.c.l.b16 %v1552
    %v2211 = vunpack.c.h.b16 %v1552
    %v2212 = vunpack.c.l.b16 %v1553
    %v2213 = vunpack.c.h.b16 %v1553
    %v2214 = vunpack.c.l.b16 %v1554
    %v2215 = vunpack.c.l.b16 %v1555
    %v2216 = vunpack.c.h.b16 %v1555
    %v2217 = vunpack.c.l.b16 %v1556
    %v2218 = vunpack.c.h.b16 %v1556
    %v2219 = vunpack.c.l.b16 %v1557
    %v2220 = vunpack.c.h.b16 %v1557
    %v2221 = vunpack.c.l.b16 %v1558
    %v2222 = vunpack.c.l.b16 %v1559
    %v2223 = vunpack.c.h.b16 %v1559
    %v2224 = vunpack.c.l.b16 %v1560
    %v2225 = vunpack.c.h.b16 %v1560
    %v2226 = vunpack.c.l.b16 %v1561
    %v2227 = vunpack.c.h.b16 %v1561
    %v2228 = vunpack.c.l.b16 %v1562
    %v2229 = vunpack.c.l.b16 %v1563
    %v2230 = vunpack.c.h.b16 %v1563
    %v2231 = vunpack.c.l.b16 %v1564
    %v2232 = vunpack.c.h.b16 %v1564
    %v2233 = vunpack.c.l.b16 %v1565
    %v2234 = vunpack.c.h.b16 %v1565
    %v2235 = vunpack.c.l.b16 %v1566
    %v2236 = vunpack.c.l.b16 %v1567
    %v2237 = vunpack.c.h.b16 %v1567
    %v2238 = vunpack.c.l.b16 %v1568
    %v2239 = vunpack.c.h.b16 %v1568
    %v2240 = vunpack.c.l.b16 %v1569
    %v2241 = vunpack.c.h.b16 %v1569
    %v2242 = vunpack.c.l.b16 %v1570
    %v2243 = vunpack.c.l.b16 %v1571
    %v2244 = vunpack.c.h.b16 %v1571
    %v2245 = vunpack.c.l.b16 %v1572
    %v2246 = vunpack.c.h.b16 %v1572
    %v2247 = vunpack.c.l.b16 %v1573
    %v2248 = vunpack.c.h.b16 %v1573
    %v2249 = vunpack.c.l.b16 %v1574
    %v2250 = vunpack.c.l.b16 %v1575
    %v2251 = vunpack.c.h.b16 %v1575
    %v2252 = vunpack.c.l.b16 %v1576
    %v2253 = vunpack.c.h.b16 %v1576
    %v2254 = vunpack.c.l.b16 %v1577
    %v2255 = vunpack.c.h.b16 %v1577
    %v2256 = vunpack.c.l.b16 %v1578
    %v2257 = vunpack.c.l.b16 %v1579
    %v2258 = vunpack.c.h.b16 %v1579
    %v2259 = vunpack.c.l.b16 %v1580
    %v2260 = vunpack.c.h.b16 %v1580
    %v2261 = vunpack.c.l.b16 %v1581
    %v2262 = vunpack.c.h.b16 %v1581
    %v2263 = vunpack.c.l.b16 %v1582
    %v2264 = vunpack.c.l.b16 %v1583
    %v2265 = vunpack.c.h.b16 %v1583
    %v2266 = vunpack.c.l.b16 %v1584
    %v2267 = vunpack.c.h.b16 %v1584
    %v2268 = vunpack.c.l.b16 %v1585
    %v2269 = vunpack.c.h.b16 %v1585
    %v2270 = vunpack.c.l.b16 %v1586
    %v2271 = vunpack.c.l.b16 %v1587
    %v2272 = vunpack.c.h.b16 %v1587
    %v2273 = vunpack.c.l.b16 %v1588
    %v2274 = vunpack.c.h.b16 %v1588
    %v2275 = vunpack.c.l.b16 %v1589
    %v2276 = vunpack.c.h.b16 %v1589
    %v2277 = vunpack.c.l.b16 %v1590
    %v2278 = vunpack.c.l.b16 %v1591
    %v2279 = vunpack.c.h.b16 %v1591
    %v2280 = vunpack.c.l.b16 %v1592
    %v2281 = vunpack.c.h.b16 %v1592
    %v2282 = vunpack.c.l.b16 %v1593
    %v2283 = vunpack.c.h.b16 %v1593
    %v2284 = vunpack.c.l.b16 %v1594
    %v2285 = vunpack.c.l.b16 %v1595
    %v2286 = vunpack.c.h.b16 %v1595
    %v2287 = vunpack.c.l.b16 %v1596
    %v2288 = vunpack.c.h.b16 %v1596
    %v2289 = vunpack.c.l.b16 %v1597
    %v2290 = vunpack.c.h.b16 %v1597
    %v2291 = vunpack.c.l.b16 %v1598
    %v2292 = vunpack.c.l.b16 %v1599
    %v2293 = vunpack.c.h.b16 %v1599
    %v2294 = vunpack.c.l.b16 %v1600
    %v2295 = vunpack.c.h.b16 %v1600
    %v2296 = vunpack.c.l.b16 %v1601
    %v2297 = vunpack.c.h.b16 %v1601
    %v2298 = vunpack.c.l.b16 %v1602
    %v2299 = vunpack.c.l.b16 %v1603
    %v2300 = vunpack.c.h.b16 %v1603
    %v2301 = vunpack.c.l.b16 %v1604
    %v2302 = vunpack.c.h.b16 %v1604
    %v2303 = vunpack.c.l.b16 %v1605
    %v2304 = vunpack.c.h.b16 %v1605
    %v2305 = vunpack.c.l.b16 %v1606
    %v2306 = vunpack.c.l.b16 %v1607
    %v2307 = vunpack.c.h.b16 %v1607
    %v2308 = vunpack.c.l.b16 %v1608
    %v2309 = vunpack.c.h.b16 %v1608
    %v2310 = vunpack.c.l.b16 %v1609
    %v2311 = vunpack.c.h.b16 %v1609
    %v2312 = vunpack.c.l.b16 %v1610
    %v2313 = vunpack.c.l.b16 %v1611
    %v2314 = vunpack.c.h.b16 %v1611
    %v2315 = vunpack.c.l.b16 %v1612
    %v2316 = vunpack.c.h.b16 %v1612
    %v2317 = vunpack.c.l.b16 %v1613
    %v2318 = vunpack.c.h.b16 %v1613
    %v2319 = vunpack.c.l.b16 %v1614
    %v2320 = vunpack.c.l.b16 %v1615
    %v2321 = vunpack.c.h.b16 %v1615
    %v2322 = vunpack.c.l.b16 %v1616
    %v2323 = vunpack.c.h.b16 %v1616
    %v2324 = vunpack.c.l.b16 %v1617
    %v2325 = vunpack.c.h.b16 %v1617
    %v2326 = vunpack.c.l.b16 %v1618
    %v2327 = vunpack.c.l.b16 %v1619
    %v2328 = vunpack.c.h.b16 %v1619
    %v2329 = vunpack.c.l.b16 %v1620
    %v2330 = vunpack.c.h.b16 %v1620
    %v2331 = vunpack.c.l.b16 %v1621
    %v2332 = vunpack.c.h.b16 %v1621
    %v2333 = vunpack.c.l.b16 %v1622
    %v2334 = vunpack.c.l.b16 %v1623
    %v2335 = vunpack.c.h.b16 %v1623
    %v2336 = vunpack.c.l.b16 %v1624
    %v2337 = vunpack.c.h.b16 %v1624
    %v2338 = vunpack.c.l.b16 %v1625
    %v2339 = vunpack.c.h.b16 %v1625
    %v2340 = vunpack.c.l.b16 %v1626
    %v2341 = vunpack.c.l.b16 %v1627
    %v2342 = vunpack.c.h.b16 %v1627
    %v2343 = vunpack.c.l.b16 %v1628
    %v2344 = vunpack.c.h.b16 %v1628
    %v2345 = vunpack.c.l.b16 %v1629
    %v2346 = vunpack.c.h.b16 %v1629
    %v2347 = vunpack.c.l.b16 %v1630
    %v2348 = vunpack.c.l.b16 %v1631
    %v2349 = vunpack.c.h.b16 %v1631
    %v2350 = vunpack.c.l.b16 %v1632
    %v2351 = vunpack.c.h.b16 %v1632
    %v2352 = vunpack.c.l.b16 %v1633
    %v2353 = vunpack.c.h.b16 %v1633
    %v2354 = vunpack.c.l.b16 %v1634
    %v2355 = vunpack.c.l.b16 %v1635
    %v2356 = vunpack.c.h.b16 %v1635
    %v2357 = vunpack.c.l.b16 %v1636
    %v2358 = vunpack.c.h.b16 %v1636
    %v2359 = vunpack.c.l.b16 %v1637
    %v2360 = vunpack.c.h.b16 %v1637
    %v2361 = vunpack.c.l.b16 %v1638
    %v2362 = vunpack.c.l.b16 %v1639
    %v2363 = vunpack.c.h.b16 %v1639
    %v2364 = vunpack.c.l.b16 %v1640
    %v2365 = vunpack.c.h.b16 %v1640
    %v2366 = vunpack.c.l.b16 %v1641
    %v2367 = vunpack.c.h.b16 %v1641
    %v2368 = vunpack.c.l.b16 %v1642
    %v2369 = vunpack.c.l.b16 %v1643
    %v2370 = vunpack.c.h.b16 %v1643
    %v2371 = vunpack.c.l.b16 %v1644
    %v2372 = vunpack.c.h.b16 %v1644
    %v2373 = vunpack.c.l.b16 %v1645
    %v2374 = vunpack.c.h.b16 %v1645
    %v2375 = vunpack.c.l.b16 %v1646
    %v2376 = vunpack.c.l.b16 %v1647
    %v2377 = vunpack.c.h.b16 %v1647
    %v2378 = vunpack.c.l.b16 %v1648
    %v2379 = vunpack.c.h.b16 %v1648
    %v2380 = vunpack.c.l.b16 %v1649
    %v2381 = vunpack.c.h.b16 %v1649
    %v2382 = vunpack.c.l.b16 %v1650
    %v2383 = vunpack.c.l.b16 %v1651
    %v2384 = vunpack.c.h.b16 %v1651
    %v2385 = vunpack.c.l.b16 %v1652
    %v2386 = vunpack.c.h.b16 %v1652
    %v2387 = vunpack.c.l.b16 %v1653
    %v2388 = vunpack.c.h.b16 %v1653
    %v2389 = vunpack.c.l.b16 %v1654
    %v2390 = vunpack.c.l.b16 %v1655
    %v2391 = vunpack.c.h.b16 %v1655
    %v2392 = vunpack.c.l.b16 %v1656
    %v2393 = vunpack.c.h.b16 %v1656
    %v2394 = vunpack.c.l.b16 %v1657
    %v2395 = vunpack.c.h.b16 %v1657
    %v2396 = vunpack.c.l.b16 %v1658
    %v2397 = vunpack.c.l.b16 %v1659
    %v2398 = vunpack.c.h.b16 %v1659
    %v2399 = vunpack.c.l.b16 %v1660
    %v2400 = vunpack.c.h.b16 %v1660
    %v2401 = vunpack.c.l.b16 %v1661
    %v2402 = vunpack.c.h.b16 %v1661
    %v2403 = vunpack.c.l.b16 %v1662
    %v2404 = vpack.c.b16 %v1963, %v1956
    %v2405 = vpack.c.b16 %v1964, %v1957
    %v2406 = vpack.c.b16 %v1965, %v1958
    %v2407 = vpack.c.b16 %v1966, %v1959
    %v2408 = vpack.c.b16 %v1967, %v1960
    %v2409 = vpack.c.b16 %v1968, %v1961
    %v2410 = vpack.c.b16 %v1969, %v1962
    %v2411 = vpack.c.b16 %v1977, %v1970
    %v2412 = vpack.c.b16 %v1978, %v1971
    %v2413 = vpack.c.b16 %v1979, %v1972
    %v2414 = vpack.c.b16 %v1980, %v1973
    %v2415 = vpack.c.b16 %v1981, %v1974
    %v2416 = vpack.c.b16 %v1982, %v1975
    %v2417 = vpack.c.b16 %v1983, %v1976
    %v2418 = vpack.c.b16 %v1991, %v1984
    %v2419 = vpack.c.b16 %v1992, %v1985
    %v2420 = vpack.c.b16 %v1993, %v1986
    %v2421 = vpack.c.b16 %v1994, %v1987
    %v2422 = vpack.c.b16 %v1995, %v1988
    %v2423 = vpack.c.b16 %v1996, %v1989
    %v2424 = vpack.c.b16 %v1997, %v1990
    %v2425 = vpack.c.b16 %v2005, %v1998
    %v2426 = vpack.c.b16 %v2006, %v1999
    %v2427 = vpack.c.b16 %v2007, %v2000
    %v2428 = vpack.c.b16 %v2008, %v2001
    %v2429 = vpack.c.b16 %v2009, %v2002
    %v2430 = vpack.c.b16 %v2010, %v2003
    %v2431 = vpack.c.b16 %v2011, %v2004
    %v2432 = vpack.c.b16 %v2019, %v2012
    %v2433 = vpack.c.b16 %v2020, %v2013
    %v2434 = vpack.c.b16 %v2021, %v2014
    %v2435 = vpack.c.b16 %v2022, %v2015
    %v2436 = vpack.c.b16 %v2023, %v2016
    %v2437 = vpack.c.b16 %v2024, %v2017
    %v2438 = vpack.c.b16 %v2025, %v2018
    %v2439 = vpack.c.b16 %v2033, %v2026
    %v2440 = vpack.c.b16 %v2034, %v2027
    %v2441 = vpack.c.b16 %v2035, %v2028
    %v2442 = vpack.c.b16 %v2036, %v2029
    %v2443 = vpack.c.b16 %v2037, %v2030
    %v2444 = vpack.c.b16 %v2038, %v2031
    %v2445 = vpack.c.b16 %v2039, %v2032
    %v2446 = vpack.c.b16 %v2047, %v2040
    %v2447 = vpack.c.b16 %v2048, %v2041
    %v2448 = vpack.c.b16 %v2049, %v2042
    %v2449 = vpack.c.b16 %v2050, %v2043
    %v2450 = vpack.c.b16 %v2051, %v2044
    %v2451 = vpack.c.b16 %v2052, %v2045
    %v2452 = vpack.c.b16 %v2053, %v2046
    %v2453 = vpack.c.b16 %v2061, %v2054
    %v2454 = vpack.c.b16 %v2062, %v2055
    %v2455 = vpack.c.b16 %v2063, %v2056
    %v2456 = vpack.c.b16 %v2064, %v2057
    %v2457 = vpack.c.b16 %v2065, %v2058
    %v2458 = vpack.c.b16 %v2066, %v2059
    %v2459 = vpack.c.b16 %v2067, %v2060
    %v2460 = vpack.c.b16 %v2075, %v2068
    %v2461 = vpack.c.b16 %v2076, %v2069
    %v2462 = vpack.c.b16 %v2077, %v2070
    %v2463 = vpack.c.b16 %v2078, %v2071
    %v2464 = vpack.c.b16 %v2079, %v2072
    %v2465 = vpack.c.b16 %v2080, %v2073
    %v2466 = vpack.c.b16 %v2081, %v2074
    %v2467 = vpack.c.b16 %v2089, %v2082
    %v2468 = vpack.c.b16 %v2090, %v2083
    %v2469 = vpack.c.b16 %v2091, %v2084
    %v2470 = vpack.c.b16 %v2092, %v2085
    %v2471 = vpack.c.b16 %v2093, %v2086
    %v2472 = vpack.c.b16 %v2094, %v2087
    %v2473 = vpack.c.b16 %v2095, %v2088
    %v2474 = vpack.c.b16 %v2103, %v2096
    %v2475 = vpack.c.b16 %v2104, %v2097
    %v2476 = vpack.c.b16 %v2105, %v2098
    %v2477 = vpack.c.b16 %v2106, %v2099
    %v2478 = vpack.c.b16 %v2107, %v2100
    %v2479 = vpack.c.b16 %v2108, %v2101
    %v2480 = vpack.c.b16 %v2109, %v2102
    %v2481 = vpack.c.b16 %v2117, %v2110
    %v2482 = vpack.c.b16 %v2118, %v2111
    %v2483 = vpack.c.b16 %v2119, %v2112
    %v2484 = vpack.c.b16 %v2120, %v2113
    %v2485 = vpack.c.b16 %v2121, %v2114
    %v2486 = vpack.c.b16 %v2122, %v2115
    %v2487 = vpack.c.b16 %v2123, %v2116
    %v2488 = vpack.c.b16 %v2131, %v2124
    %v2489 = vpack.c.b16 %v2132, %v2125
    %v2490 = vpack.c.b16 %v2133, %v2126
    %v2491 = vpack.c.b16 %v2134, %v2127
    %v2492 = vpack.c.b16 %v2135, %v2128
    %v2493 = vpack.c.b16 %v2136, %v2129
    %v2494 = vpack.c.b16 %v2137, %v2130
    %v2495 = vpack.c.b16 %v2145, %v2138
    %v2496 = vpack.c.b16 %v2146, %v2139
    %v2497 = vpack.c.b16 %v2147, %v2140
    %v2498 = vpack.c.b16 %v2148, %v2141
    %v2499 = vpack.c.b16 %v2149, %v2142
    %v2500 = vpack.c.b16 %v2150, %v2143
    %v2501 = vpack.c.b16 %v2151, %v2144
    %v2502 = vpack.c.b16 %v2159, %v2152
    %v2503 = vpack.c.b16 %v2160, %v2153
    %v2504 = vpack.c.b16 %v2161, %v2154
    %v2505 = vpack.c.b16 %v2162, %v2155
    %v2506 = vpack.c.b16 %v2163, %v2156
    %v2507 = vpack.c.b16 %v2164, %v2157
    %v2508 = vpack.c.b16 %v2165, %v2158
    %v2509 = vpack.c.b16 %v2173, %v2166
    %v2510 = vpack.c.b16 %v2174, %v2167
    %v2511 = vpack.c.b16 %v2175, %v2168
    %v2512 = vpack.c.b16 %v2176, %v2169
    %v2513 = vpack.c.b16 %v2177, %v2170
    %v2514 = vpack.c.b16 %v2178, %v2171
    %v2515 = vpack.c.b16 %v2179, %v2172
    %v2516 = vpack.c.b16 %v2187, %v2180
    %v2517 = vpack.c.b16 %v2188, %v2181
    %v2518 = vpack.c.b16 %v2189, %v2182
    %v2519 = vpack.c.b16 %v2190, %v2183
    %v2520 = vpack.c.b16 %v2191, %v2184
    %v2521 = vpack.c.b16 %v2192, %v2185
    %v2522 = vpack.c.b16 %v2193, %v2186
    %v2523 = vpack.c.b16 %v2201, %v2194
    %v2524 = vpack.c.b16 %v2202, %v2195
    %v2525 = vpack.c.b16 %v2203, %v2196
    %v2526 = vpack.c.b16 %v2204, %v2197
    %v2527 = vpack.c.b16 %v2205, %v2198
    %v2528 = vpack.c.b16 %v2206, %v2199
    %v2529 = vpack.c.b16 %v2207, %v2200
    %v2530 = vpack.c.b16 %v2215, %v2208
    %v2531 = vpack.c.b16 %v2216, %v2209
    %v2532 = vpack.c.b16 %v2217, %v2210
    %v2533 = vpack.c.b16 %v2218, %v2211
    %v2534 = vpack.c.b16 %v2219, %v2212
    %v2535 = vpack.c.b16 %v2220, %v2213
    %v2536 = vpack.c.b16 %v2221, %v2214
    %v2537 = vpack.c.b16 %v2229, %v2222
    %v2538 = vpack.c.b16 %v2230, %v2223
    %v2539 = vpack.c.b16 %v2231, %v2224
    %v2540 = vpack.c.b16 %v2232, %v2225
    %v2541 = vpack.c.b16 %v2233, %v2226
    %v2542 = vpack.c.b16 %v2234, %v2227
    %v2543 = vpack.c.b16 %v2235, %v2228
    %v2544 = vpack.c.b16 %v2243, %v2236
    %v2545 = vpack.c.b16 %v2244, %v2237
    %v2546 = vpack.c.b16 %v2245, %v2238
    %v2547 = vpack.c.b16 %v2246, %v2239
    %v2548 = vpack.c.b16 %v2247, %v2240
    %v2549 = vpack.c.b16 %v2248, %v2241
    %v2550 = vpack.c.b16 %v2249, %v2242
    %v2551 = vpack.c.b16 %v2257, %v2250
    %v2552 = vpack.c.b16 %v2258, %v2251
    %v2553 = vpack.c.b16 %v2259, %v2252
    %v2554 = vpack.c.b16 %v2260, %v2253
    %v2555 = vpack.c.b16 %v2261, %v2254
    %v2556 = vpack.c.b16 %v2262, %v2255
    %v2557 = vpack.c.b16 %v2263, %v2256
    %v2558 = vpack.c.b16 %v2271, %v2264
    %v2559 = vpack.c.b16 %v2272, %v2265
    %v2560 = vpack.c.b16 %v2273, %v2266
    %v2561 = vpack.c.b16 %v2274, %v2267
    %v2562 = vpack.c.b16 %v2275, %v2268
    %v2563 = vpack.c.b16 %v2276, %v2269
    %v2564 = vpack.c.b16 %v2277, %v2270
    %v2565 = vpack.c.b16 %v2285, %v2278
    %v2566 = vpack.c.b16 %v2286, %v2279
    %v2567 = vpack.c.b16 %v2287, %v2280
    %v2568 = vpack.c.b16 %v2288, %v2281
    %v2569 = vpack.c.b16 %v2289, %v2282
    %v2570 = vpack.c.b16 %v2290, %v2283
    %v2571 = vpack.c.b16 %v2291, %v2284
    %v2572 = vpack.c.b16 %v2299, %v2292
    %v2573 = vpack.c.b16 %v2300, %v2293
    %v2574 = vpack.c.b16 %v2301, %v2294
    %v2575 = vpack.c.b16 %v2302, %v2295
    %v2576 = vpack.c.b16 %v2303, %v2296
    %v2577 = vpack.c.b16 %v2304, %v2297
    %v2578 = vpack.c.b16 %v2305, %v2298
    %v2579 = vpack.c.b16 %v2313, %v2306
    %v2580 = vpack.c.b16 %v2314, %v2307
    %v2581 = vpack.c.b16 %v2315, %v2308
    %v2582 = vpack.c.b16 %v2316, %v2309
    %v2583 = vpack.c.b16 %v2317, %v2310
    %v2584 = vpack.c.b16 %v2318, %v2311
    %v2585 = vpack.c.b16 %v2319, %v2312
    %v2586 = vpack.c.b16 %v2327, %v2320
    %v2587 = vpack.c.b16 %v2328, %v2321
    %v2588 = vpack.c.b16 %v2329, %v2322
    %v2589 = vpack.c.b16 %v2330, %v2323
    %v2590 = vpack.c.b16 %v2331, %v2324
    %v2591 = vpack.c.b16 %v2332, %v2325
    %v2592 = vpack.c.b16 %v2333, %v2326
    %v2593 = vpack.c.b16 %v2341, %v2334
    %v2594 = vpack.c.b16 %v2342, %v2335
    %v2595 = vpack.c.b16 %v2343, %v2336
    %v2596 = vpack.c.b16 %v2344, %v2337
    %v2597 = vpack.c.b16 %v2345, %v2338
    %v2598 = vpack.c.b16 %v2346, %v2339
    %v2599 = vpack.c.b16 %v2347, %v2340
    %v2600 = vpack.c.b16 %v2355, %v2348
    %v2601 = vpack.c.b16 %v2356, %v2349
    %v2602 = vpack.c.b16 %v2357, %v2350
    %v2603 = vpack.c.b16 %v2358, %v2351
    %v2604 = vpack.c.b16 %v2359, %v2352
    %v2605 = vpack.c.b16 %v2360, %v2353
    %v2606 = vpack.c.b16 %v2361, %v2354
    %v2607 = vpack.c.b16 %v2369, %v2362
    %v2608 = vpack.c.b16 %v2370, %v2363
    %v2609 = vpack.c.b16 %v2371, %v2364
    %v2610 = vpack.c.b16 %v2372, %v2365
    %v2611 = vpack.c.b16 %v2373, %v2366
    %v2612 = vpack.c.b16 %v2374, %v2367
    %v2613 = vpack.c.b16 %v2375, %v2368
    %v2614 = vpack.c.b16 %v2383, %v2376
    %v2615 = vpack.c.b16 %v2384, %v2377
    %v2616 = vpack.c.b16 %v2385, %v2378
    %v2617 = vpack.c.b16 %v2386, %v2379
    %v2618 = vpack.c.b16 %v2387, %v2380
    %v2619 = vpack.c.b16 %v2388, %v2381
    %v2620 = vpack.c.b16 %v2389, %v2382
    %v2621 = vpack.c.b16 %v2397, %v2390
    %v2622 = vpack.c.b16 %v2398, %v2391
    %v2623 = vpack.c.b16 %v2399, %v2392
    %v2624 = vpack.c.b16 %v2400, %v2393
    %v2625 = vpack.c.b16 %v2401, %v2394
    %v2626 = vpack.c.b16 %v2402, %v2395
    %v2627 = vpack.c.b16 %v2403, %v2396
    %2852 = vmatprep.subr.bf16.mxu0 %v2405
    %2853 = vmatpush1.bf16.msra.mxu0 %v2404
    %2854 = vmatprep.subr.bf16.mxu0 %v2412
    %2855 = vmatpush1.bf16.msra.mxu0 %v2411
    %2856 = vmatprep.subr.bf16.mxu0 %v2419
    %2857 = vmatpush1.bf16.msra.mxu0 %v2418
    %2858 = vmatprep.subr.bf16.mxu0 %v2426
    %2859 = vmatpush1.bf16.msra.mxu0 %v2425
    %2860 = vmatprep.subr.bf16.mxu0 %v2433
    %2861 = vmatpush1.bf16.msra.mxu0 %v2432
    %2862 = vmatprep.subr.bf16.mxu0 %v2440
    %2863 = vmatpush1.bf16.msra.mxu0 %v2439
    %2864 = vmatprep.subr.bf16.mxu0 %v2447
    %2865 = vmatpush1.bf16.msra.mxu0 %v2446
    %2866 = vmatprep.subr.bf16.mxu0 %v2454
    %2867 = vmatpush1.bf16.msra.mxu0 %v2453
    %2868 = vmatprep.subr.bf16.mxu0 %v2461
    %2869 = vmatpush1.bf16.msra.mxu0 %v2460
    %2870 = vmatprep.subr.bf16.mxu0 %v2468
    %2871 = vmatpush1.bf16.msra.mxu0 %v2467
    %2872 = vmatprep.subr.bf16.mxu0 %v2475
    %2873 = vmatpush1.bf16.msra.mxu0 %v2474
    %2874 = vmatprep.subr.bf16.mxu0 %v2482
    %2875 = vmatpush1.bf16.msra.mxu0 %v2481
    %2876 = vmatprep.subr.bf16.mxu0 %v2489
    %2877 = vmatpush1.bf16.msra.mxu0 %v2488
    %2878 = vmatprep.subr.bf16.mxu0 %v2496
    %2879 = vmatpush1.bf16.msra.mxu0 %v2495
    %2880 = vmatprep.subr.bf16.mxu0 %v2503
    %2881 = vmatpush1.bf16.msra.mxu0 %v2502
    %2882 = vmatprep.subr.bf16.mxu0 %v2510
    %2883 = vmatpush1.bf16.msra.mxu0 %v2509
    %2884 = vmatprep.mubr.bf16.mxu0 %v1404
    %2885 = vmatmul.mubr.bf16.gmra.mrb[0].mxu0 %v1403
    %v2886 = vpop.f32.mrb[0].mxu0
    %v2887 = vadd.f32 %v1668, %v2886
    %v2888 = vpop.f32.mrb[0].mxu0
    %v2889 = vadd.f32 %v1672, %v2888
    %v2890 = vpop.f32.mrb[0].mxu0
    %v2891 = vpop.f32.mrb[0].mxu0
    %2892 = vdwg.mxu0
    %2893 = vmatprep.subr.bf16.mxu0 %v2517
    %2894 = vmatpush1.bf16.msra.mxu0 %v2516
    %2895 = vmatprep.subr.bf16.mxu0 %v2524
    %2896 = vmatpush1.bf16.msra.mxu0 %v2523
    %2897 = vmatprep.subr.bf16.mxu0 %v2531
    %2898 = vmatpush1.bf16.msra.mxu0 %v2530
    %2899 = vmatprep.subr.bf16.mxu0 %v2538
    %2900 = vmatpush1.bf16.msra.mxu0 %v2537
    %2901 = vmatprep.subr.bf16.mxu0 %v2545
    %2902 = vmatpush1.bf16.msra.mxu0 %v2544
    %2903 = vmatprep.subr.bf16.mxu0 %v2552
    %2904 = vmatpush1.bf16.msra.mxu0 %v2551
    %2905 = vmatprep.subr.bf16.mxu0 %v2559
    %2906 = vmatpush1.bf16.msra.mxu0 %v2558
    %2907 = vmatprep.subr.bf16.mxu0 %v2566
    %2908 = vmatpush1.bf16.msra.mxu0 %v2565
    %2909 = vmatprep.subr.bf16.mxu0 %v2573
    %2910 = vmatpush1.bf16.msra.mxu0 %v2572
    %2911 = vmatprep.subr.bf16.mxu0 %v2580
    %2912 = vmatpush1.bf16.msra.mxu0 %v2579
    %2913 = vmatprep.subr.bf16.mxu0 %v2587
    %2914 = vmatpush1.bf16.msra.mxu0 %v2586
    %2915 = vmatprep.subr.bf16.mxu0 %v2594
    %2916 = vmatpush1.bf16.msra.mxu0 %v2593
    %2917 = vmatprep.subr.bf16.mxu0 %v2601
    %2918 = vmatpush1.bf16.msra.mxu0 %v2600
    %2919 = vmatprep.subr.bf16.mxu0 %v2608
    %2920 = vmatpush1.bf16.msra.mxu0 %v2607
    %2921 = vmatprep.subr.bf16.mxu0 %v2615
    %2922 = vmatpush1.bf16.msra.mxu0 %v2614
    %2923 = vmatprep.subr.bf16.mxu0 %v2622
    %2924 = vmatpush1.bf16.msra.mxu0 %v2621
    %2925 = vmatprep.mubr.bf16.mxu0 %v1406
    %2926 = vmatmul.mubr.bf16.gmra.mrb[0].mxu0 %v1405
    %v2927 = vpop.f32.mrb[0].mxu0
    %v2928 = vadd.f32 %v2887, %v2927
    %v2929 = vpop.f32.mrb[0].mxu0
    %v2930 = vadd.f32 %v2889, %v2929
    %v2931 = vpop.f32.mrb[0].mxu0
    %v2932 = vpop.f32.mrb[0].mxu0
    %2933 = vdwg.mxu0
    %2934 = vmatprep.subr.bf16.mxu0 %v2407
    %2935 = vmatpush1.bf16.msra.mxu0 %v2406
    %2936 = vmatprep.subr.bf16.mxu0 %v2414
    %2937 = vmatpush1.bf16.msra.mxu0 %v2413
    %2938 = vmatprep.subr.bf16.mxu0 %v2421
    %2939 = vmatpush1.bf16.msra.mxu0 %v2420
    %2940 = vmatprep.subr.bf16.mxu0 %v2428
    %2941 = vmatpush1.bf16.msra.mxu0 %v2427
    %2942 = vmatprep.subr.bf16.mxu0 %v2435
    %2943 = vmatpush1.bf16.msra.mxu0 %v2434
    %2944 = vmatprep.subr.bf16.mxu0 %v2442
    %2945 = vmatpush1.bf16.msra.mxu0 %v2441
    %2946 = vmatprep.subr.bf16.mxu0 %v2449
    %2947 = vmatpush1.bf16.msra.mxu0 %v2448
    %2948 = vmatprep.subr.bf16.mxu0 %v2456
    %2949 = vmatpush1.bf16.msra.mxu0 %v2455
    %2950 = vmatprep.subr.bf16.mxu0 %v2463
    %2951 = vmatpush1.bf16.msra.mxu0 %v2462
    %2952 = vmatprep.subr.bf16.mxu0 %v2470
    %2953 = vmatpush1.bf16.msra.mxu0 %v2469
    %2954 = vmatprep.subr.bf16.mxu0 %v2477
    %2955 = vmatpush1.bf16.msra.mxu0 %v2476
    %2956 = vmatprep.subr.bf16.mxu0 %v2484
    %2957 = vmatpush1.bf16.msra.mxu0 %v2483
    %2958 = vmatprep.subr.bf16.mxu0 %v2491
    %2959 = vmatpush1.bf16.msra.mxu0 %v2490
    %2960 = vmatprep.subr.bf16.mxu0 %v2498
    %2961 = vmatpush1.bf16.msra.mxu0 %v2497
    %2962 = vmatprep.subr.bf16.mxu0 %v2505
    %2963 = vmatpush1.bf16.msra.mxu0 %v2504
    %2964 = vmatprep.subr.bf16.mxu0 %v2512
    %2965 = vmatpush1.bf16.msra.mxu0 %v2511
    %2966 = vmatprep.mubr.bf16.mxu0 %v1404
    %2967 = vmatmul.mubr.bf16.gmra.mrb[0].mxu0 %v1403
    %v2968 = vpop.f32.mrb[0].mxu0
    %v2969 = vadd.f32 %v1676, %v2968
    %v2970 = vpop.f32.mrb[0].mxu0
    %v2971 = vadd.f32 %v1680, %v2970
    %v2972 = vpop.f32.mrb[0].mxu0
    %v2973 = vpop.f32.mrb[0].mxu0
    %2974 = vdwg.mxu0
    %2975 = vmatprep.subr.bf16.mxu0 %v2519
    %2976 = vmatpush1.bf16.msra.mxu0 %v2518
    %2977 = vmatprep.subr.bf16.mxu0 %v2526
    %2978 = vmatpush1.bf16.msra.mxu0 %v2525
    %2979 = vmatprep.subr.bf16.mxu0 %v2533
    %2980 = vmatpush1.bf16.msra.mxu0 %v2532
    %2981 = vmatprep.subr.bf16.mxu0 %v2540
    %2982 = vmatpush1.bf16.msra.mxu0 %v2539
    %2983 = vmatprep.subr.bf16.mxu0 %v2547
    %2984 = vmatpush1.bf16.msra.mxu0 %v2546
    %2985 = vmatprep.subr.bf16.mxu0 %v2554
    %2986 = vmatpush1.bf16.msra.mxu0 %v2553
    %2987 = vmatprep.subr.bf16.mxu0 %v2561
    %2988 = vmatpush1.bf16.msra.mxu0 %v2560
    %2989 = vmatprep.subr.bf16.mxu0 %v2568
    %2990 = vmatpush1.bf16.msra.mxu0 %v2567
    %2991 = vmatprep.subr.bf16.mxu0 %v2575
    %2992 = vmatpush1.bf16.msra.mxu0 %v2574
    %2993 = vmatprep.subr.bf16.mxu0 %v2582
    %2994 = vmatpush1.bf16.msra.mxu0 %v2581
    %2995 = vmatprep.subr.bf16.mxu0 %v2589
    %2996 = vmatpush1.bf16.msra.mxu0 %v2588
    %2997 = vmatprep.subr.bf16.mxu0 %v2596
    %2998 = vmatpush1.bf16.msra.mxu0 %v2595
    %2999 = vmatprep.subr.bf16.mxu0 %v2603
    %3000 = vmatpush1.bf16.msra.mxu0 %v2602
    %3001 = vmatprep.subr.bf16.mxu0 %v2610
    %3002 = vmatpush1.bf16.msra.mxu0 %v2609
    %3003 = vmatprep.subr.bf16.mxu0 %v2617
    %3004 = vmatpush1.bf16.msra.mxu0 %v2616
    %3005 = vmatprep.subr.bf16.mxu0 %v2624
    %3006 = vmatpush1.bf16.msra.mxu0 %v2623
    %3007 = vmatprep.mubr.bf16.mxu0 %v1406
    %3008 = vmatmul.mubr.bf16.gmra.mrb[0].mxu0 %v1405
    %v3009 = vpop.f32.mrb[0].mxu0
    %v3010 = vadd.f32 %v2969, %v3009
    %v3011 = vpop.f32.mrb[0].mxu0
    %v3012 = vadd.f32 %v2971, %v3011
    %v3013 = vpop.f32.mrb[0].mxu0
    %v3014 = vpop.f32.mrb[0].mxu0
    %3015 = vdwg.mxu0
    %3016 = vmatprep.subr.bf16.mxu0 %v2409
    %3017 = vmatpush1.bf16.msra.mxu0 %v2408
    %3018 = vmatprep.subr.bf16.mxu0 %v2416
    %3019 = vmatpush1.bf16.msra.mxu0 %v2415
    %3020 = vmatprep.subr.bf16.mxu0 %v2423
    %3021 = vmatpush1.bf16.msra.mxu0 %v2422
    %3022 = vmatprep.subr.bf16.mxu0 %v2430
    %3023 = vmatpush1.bf16.msra.mxu0 %v2429
    %3024 = vmatprep.subr.bf16.mxu0 %v2437
    %3025 = vmatpush1.bf16.msra.mxu0 %v2436
    %3026 = vmatprep.subr.bf16.mxu0 %v2444
    %3027 = vmatpush1.bf16.msra.mxu0 %v2443
    %3028 = vmatprep.subr.bf16.mxu0 %v2451
    %3029 = vmatpush1.bf16.msra.mxu0 %v2450
    %3030 = vmatprep.subr.bf16.mxu0 %v2458
    %3031 = vmatpush1.bf16.msra.mxu0 %v2457
    %3032 = vmatprep.subr.bf16.mxu0 %v2465
    %3033 = vmatpush1.bf16.msra.mxu0 %v2464
    %3034 = vmatprep.subr.bf16.mxu0 %v2472
    %3035 = vmatpush1.bf16.msra.mxu0 %v2471
    %3036 = vmatprep.subr.bf16.mxu0 %v2479
    %3037 = vmatpush1.bf16.msra.mxu0 %v2478
    %3038 = vmatprep.subr.bf16.mxu0 %v2486
    %3039 = vmatpush1.bf16.msra.mxu0 %v2485
    %3040 = vmatprep.subr.bf16.mxu0 %v2493
    %3041 = vmatpush1.bf16.msra.mxu0 %v2492
    %3042 = vmatprep.subr.bf16.mxu0 %v2500
    %3043 = vmatpush1.bf16.msra.mxu0 %v2499
    %3044 = vmatprep.subr.bf16.mxu0 %v2507
    %3045 = vmatpush1.bf16.msra.mxu0 %v2506
    %3046 = vmatprep.subr.bf16.mxu0 %v2514
    %3047 = vmatpush1.bf16.msra.mxu0 %v2513
    %3048 = vmatprep.mubr.bf16.mxu0 %v1404
    %3049 = vmatmul.mubr.bf16.gmra.mrb[0].mxu0 %v1403
    %v3050 = vpop.f32.mrb[0].mxu0
    %v3051 = vadd.f32 %v1684, %v3050
    %v3052 = vpop.f32.mrb[0].mxu0
    %v3053 = vadd.f32 %v1688, %v3052
    %v3054 = vpop.f32.mrb[0].mxu0
    %v3055 = vpop.f32.mrb[0].mxu0
    %3056 = vdwg.mxu0
    %3057 = vmatprep.subr.bf16.mxu0 %v2521
    %3058 = vmatpush1.bf16.msra.mxu0 %v2520
    %3059 = vmatprep.subr.bf16.mxu0 %v2528
    %3060 = vmatpush1.bf16.msra.mxu0 %v2527
    %3061 = vmatprep.subr.bf16.mxu0 %v2535
    %3062 = vmatpush1.bf16.msra.mxu0 %v2534
    %3063 = vmatprep.subr.bf16.mxu0 %v2542
    %3064 = vmatpush1.bf16.msra.mxu0 %v2541
    %3065 = vmatprep.subr.bf16.mxu0 %v2549
    %3066 = vmatpush1.bf16.msra.mxu0 %v2548
    %3067 = vmatprep.subr.bf16.mxu0 %v2556
    %3068 = vmatpush1.bf16.msra.mxu0 %v2555
    %3069 = vmatprep.subr.bf16.mxu0 %v2563
    %3070 = vmatpush1.bf16.msra.mxu0 %v2562
    %3071 = vmatprep.subr.bf16.mxu0 %v2570
    %3072 = vmatpush1.bf16.msra.mxu0 %v2569
    %3073 = vmatprep.subr.bf16.mxu0 %v2577
    %3074 = vmatpush1.bf16.msra.mxu0 %v2576
    %3075 = vmatprep.subr.bf16.mxu0 %v2584
    %3076 = vmatpush1.bf16.msra.mxu0 %v2583
    %3077 = vmatprep.subr.bf16.mxu0 %v2591
    %3078 = vmatpush1.bf16.msra.mxu0 %v2590
    %3079 = vmatprep.subr.bf16.mxu0 %v2598
    %3080 = vmatpush1.bf16.msra.mxu0 %v2597
    %3081 = vmatprep.subr.bf16.mxu0 %v2605
    %3082 = vmatpush1.bf16.msra.mxu0 %v2604
    %3083 = vmatprep.subr.bf16.mxu0 %v2612
    %3084 = vmatpush1.bf16.msra.mxu0 %v2611
    %3085 = vmatprep.subr.bf16.mxu0 %v2619
    %3086 = vmatpush1.bf16.msra.mxu0 %v2618
    %3087 = vmatprep.subr.bf16.mxu0 %v2626
    %3088 = vmatpush1.bf16.msra.mxu0 %v2625
    %3089 = vmatprep.mubr.bf16.mxu0 %v1406
    %3090 = vmatmul.mubr.bf16.gmra.mrb[0].mxu0 %v1405
    %v3091 = vpop.f32.mrb[0].mxu0
    %v3092 = vadd.f32 %v3051, %v3091
    %v3093 = vpop.f32.mrb[0].mxu0
    %v3094 = vadd.f32 %v3053, %v3093
    %v3095 = vpop.f32.mrb[0].mxu0
    %v3096 = vpop.f32.mrb[0].mxu0
    %3097 = vdwg.mxu0
    %3098 = vmatprep.subr.bf16.mxu0 0
    %3099 = vmatpush1.bf16.msra.mxu0 %v2410
    %3100 = vmatprep.subr.bf16.mxu0 0
    %3101 = vmatpush1.bf16.msra.mxu0 %v2417
    %3102 = vmatprep.subr.bf16.mxu0 0
    %3103 = vmatpush1.bf16.msra.mxu0 %v2424
    %3104 = vmatprep.subr.bf16.mxu0 0
    %3105 = vmatpush1.bf16.msra.mxu0 %v2431
    %3106 = vmatprep.subr.bf16.mxu0 0
    %3107 = vmatpush1.bf16.msra.mxu0 %v2438
    %3108 = vmatprep.subr.bf16.mxu0 0
    %3109 = vmatpush1.bf16.msra.mxu0 %v2445
    %3110 = vmatprep.subr.bf16.mxu0 0
    %3111 = vmatpush1.bf16.msra.mxu0 %v2452
    %3112 = vmatprep.subr.bf16.mxu0 0
    %3113 = vmatpush1.bf16.msra.mxu0 %v2459
    %3114 = vmatprep.subr.bf16.mxu0 0
    %3115 = vmatpush1.bf16.msra.mxu0 %v2466
    %3116 = vmatprep.subr.bf16.mxu0 0
    %3117 = vmatpush1.bf16.msra.mxu0 %v2473
    %3118 = vmatprep.subr.bf16.mxu0 0
    %3119 = vmatpush1.bf16.msra.mxu0 %v2480
    %3120 = vmatprep.subr.bf16.mxu0 0
    %3121 = vmatpush1.bf16.msra.mxu0 %v2487
    %3122 = vmatprep.subr.bf16.mxu0 0
    %3123 = vmatpush1.bf16.msra.mxu0 %v2494
    %3124 = vmatprep.subr.bf16.mxu0 0
    %3125 = vmatpush1.bf16.msra.mxu0 %v2501
    %3126 = vmatprep.subr.bf16.mxu0 0
    %3127 = vmatpush1.bf16.msra.mxu0 %v2508
    %3128 = vmatprep.subr.bf16.mxu0 0
    %3129 = vmatpush1.bf16.msra.mxu0 %v2515
    %3130 = vmatprep.mubr.bf16.mxu0 %v1404
    %3131 = vmatmul.mubr.bf16.gmra.mrb[0].mxu0 %v1403
    %v3132 = vpop.f32.mrb[0].mxu0
    %v3133 = vadd.f32 %v1692, %v3132
    %v3134 = vpop.f32.mrb[0].mxu0
    %v3135 = vpop.f32.mrb[0].mxu0
    %v3136 = vpop.f32.mrb[0].mxu0
    %3137 = vdwg.mxu0
    %3138 = vmatprep.subr.bf16.mxu0 0
    %3139 = vmatpush1.bf16.msra.mxu0 %v2522
    %3140 = vmatprep.subr.bf16.mxu0 0
    %3141 = vmatpush1.bf16.msra.mxu0 %v2529
    %3142 = vmatprep.subr.bf16.mxu0 0
    %3143 = vmatpush1.bf16.msra.mxu0 %v2536
    %3144 = vmatprep.subr.bf16.mxu0 0
    %3145 = vmatpush1.bf16.msra.mxu0 %v2543
    %3146 = vmatprep.subr.bf16.mxu0 0
    %3147 = vmatpush1.bf16.msra.mxu0 %v2550
    %3148 = vmatprep.subr.bf16.mxu0 0
    %3149 = vmatpush1.bf16.msra.mxu0 %v2557
    %3150 = vmatprep.subr.bf16.mxu0 0
    %3151 = vmatpush1.bf16.msra.mxu0 %v2564
    %3152 = vmatprep.subr.bf16.mxu0 0
    %3153 = vmatpush1.bf16.msra.mxu0 %v2571
    %3154 = vmatprep.subr.bf16.mxu0 0
    %3155 = vmatpush1.bf16.msra.mxu0 %v2578
    %3156 = vmatprep.subr.bf16.mxu0 0
    %3157 = vmatpush1.bf16.msra.mxu0 %v2585
    %3158 = vmatprep.subr.bf16.mxu0 0
    %3159 = vmatpush1.bf16.msra.mxu0 %v2592
    %3160 = vmatprep.subr.bf16.mxu0 0
    %3161 = vmatpush1.bf16.msra.mxu0 %v2599
    %3162 = vmatprep.subr.bf16.mxu0 0
    %3163 = vmatpush1.bf16.msra.mxu0 %v2606
    %3164 = vmatprep.subr.bf16.mxu0 0
    %3165 = vmatpush1.bf16.msra.mxu0 %v2613
    %3166 = vmatprep.subr.bf16.mxu0 0
    %3167 = vmatpush1.bf16.msra.mxu0 %v2620
    %3168 = vmatprep.subr.bf16.mxu0 0
    %3169 = vmatpush1.bf16.msra.mxu0 %v2627
    %3170 = vmatprep.mubr.bf16.mxu0 %v1406
    %3171 = vmatmul.mubr.bf16.gmra.mrb[0].mxu0 %v1405
    %v3172 = vpop.f32.mrb[0].mxu0
    %v3173 = vadd.f32 %v3133, %v3172
    %v3174 = vpop.f32.mrb[0].mxu0
    %v3175 = vpop.f32.mrb[0].mxu0
    %v3176 = vpop.f32.mrb[0].mxu0
    %3177 = vdwg.mxu0
    %vm3178 = vcmp.gt.f32.partialorder %v2928, 20.0
    %vm3179 = vcmp.gt.f32.partialorder %v2930, 20.0
    %vm3180 = vcmp.gt.f32.partialorder %v3010, 20.0
    %vm3181 = vcmp.gt.f32.partialorder %v3012, 20.0
    %vm3182 = vcmp.gt.f32.partialorder %v3092, 20.0
    %vm3183 = vcmp.gt.f32.partialorder %v3094, 20.0
    %vm3184 = vcmp.gt.f32.partialorder %v3173, 20.0
    %v3185 = vmul.f32 %v2928, 1.442695
    %v3186 = vpow.pop %v3185
    %v3187 = vmul.f32 %v2930, 1.442695
    %v3188 = vpow.pop %v3187
    %v3189 = vmul.f32 %v3010, 1.442695
    %v3190 = vpow.pop %v3189
    %v3191 = vmul.f32 %v3012, 1.442695
    %v3192 = vpow.pop %v3191
    %v3193 = vmul.f32 %v3092, 1.442695
    %v3194 = vpow.pop %v3193
    %v3195 = vmul.f32 %v3094, 1.442695
    %v3196 = vpow.pop %v3195
    %v3197 = vmul.f32 %v3173, 1.442695
    %v3198 = vpow.pop %v3197
    %v3199 = vadd.f32 %v3186, 1.0
    %v3200 = vlog2.pop %v3199
    %v3201 = vmul.f32 %v3200, 0.6931472
    %v3202 = vmul.f32 -0.5, %v3186
    %v3203 = vadd.f32 %v3202, 1.0
    %v3204 = vmul.f32 %v3203, %v3186
    %v3205 = vand.u32 2147483647, %v3186
    %vm3206 = vcmp.lt.f32.partialorder %v3205, 0.0004427343
    %v3207 = vsel %vm3206, %v3204, %v3201
    %v3208 = vadd.f32 %v3188, 1.0
    %v3209 = vlog2.pop %v3208
    %v3210 = vmul.f32 %v3209, 0.6931472
    %v3211 = vmul.f32 -0.5, %v3188
    %v3212 = vadd.f32 %v3211, 1.0
    %v3213 = vmul.f32 %v3212, %v3188
    %v3214 = vand.u32 2147483647, %v3188
    %vm3215 = vcmp.lt.f32.partialorder %v3214, 0.0004427343
    %v3216 = vsel %vm3215, %v3213, %v3210
    %v3217 = vadd.f32 %v3190, 1.0
    %v3218 = vlog2.pop %v3217
    %v3219 = vmul.f32 %v3218, 0.6931472
    %v3220 = vmul.f32 -0.5, %v3190
    %v3221 = vadd.f32 %v3220, 1.0
    %v3222 = vmul.f32 %v3221, %v3190
    %v3223 = vand.u32 2147483647, %v3190
    %vm3224 = vcmp.lt.f32.partialorder %v3223, 0.0004427343
    %v3225 = vsel %vm3224, %v3222, %v3219
    %v3226 = vadd.f32 %v3192, 1.0
    %v3227 = vlog2.pop %v3226
    %v3228 = vmul.f32 %v3227, 0.6931472
    %v3229 = vmul.f32 -0.5, %v3192
    %v3230 = vadd.f32 %v3229, 1.0
    %v3231 = vmul.f32 %v3230, %v3192
    %v3232 = vand.u32 2147483647, %v3192
    %vm3233 = vcmp.lt.f32.partialorder %v3232, 0.0004427343
    %v3234 = vsel %vm3233, %v3231, %v3228
    %v3235 = vadd.f32 %v3194, 1.0
    %v3236 = vlog2.pop %v3235
    %v3237 = vmul.f32 %v3236, 0.6931472
    %v3238 = vmul.f32 -0.5, %v3194
    %v3239 = vadd.f32 %v3238, 1.0
    %v3240 = vmul.f32 %v3239, %v3194
    %v3241 = vand.u32 2147483647, %v3194
    %vm3242 = vcmp.lt.f32.partialorder %v3241, 0.0004427343
    %v3243 = vsel %vm3242, %v3240, %v3237
    %v3244 = vadd.f32 %v3196, 1.0
    %v3245 = vlog2.pop %v3244
    %v3246 = vmul.f32 %v3245, 0.6931472
    %v3247 = vmul.f32 -0.5, %v3196
    %v3248 = vadd.f32 %v3247, 1.0
    %v3249 = vmul.f32 %v3248, %v3196
    %v3250 = vand.u32 2147483647, %v3196
    %vm3251 = vcmp.lt.f32.partialorder %v3250, 0.0004427343
    %v3252 = vsel %vm3251, %v3249, %v3246
    %v3253 = vadd.f32 %v3198, 1.0
    %v3254 = vlog2.pop %v3253
    %v3255 = vmul.f32 %v3254, 0.6931472
    %v3256 = vmul.f32 -0.5, %v3198
    %v3257 = vadd.f32 %v3256, 1.0
    %v3258 = vmul.f32 %v3257, %v3198
    %v3259 = vand.u32 2147483647, %v3198
    %vm3260 = vcmp.lt.f32.partialorder %v3259, 0.0004427343
    %v3261 = vsel %vm3260, %v3258, %v3255
    %v3262 = vsel %vm3178, %v2928, %v3207
    %v3263 = vsel %vm3179, %v2930, %v3216
    %v3264 = vsel %vm3180, %v3010, %v3225
    %v3265 = vsel %vm3181, %v3012, %v3234
    %v3266 = vsel %vm3182, %v3092, %v3243
    %v3267 = vsel %vm3183, %v3094, %v3252
    %v3268 = vsel %vm3184, %v3173, %v3261
    %3269 = vst [vmem:[#allocation10] sm:$0xff] %v3262
    %3270 = vst [vmem:[#allocation10 + $0x8] sm:$0xff] %v3263
    %3271 = vst [vmem:[#allocation10 + $0x10] sm:$0xff] %v3264
    %3272 = vst [vmem:[#allocation10 + $0x18] sm:$0xff] %v3265
    %3273 = vst [vmem:[#allocation10 + $0x20] sm:$0xff] %v3266
    %3274 = vst [vmem:[#allocation10 + $0x28] sm:$0xff] %v3267
    %3275 = vst [vmem:[#allocation10 + $0x30] sm:$0xff] %v3268
    // Predicated region
    $region38: #{tpu_custom_call.1} parent=1 // pred_check
      _
    $region39: #{tpu_custom_call.1} parent=1 // pred_check_branch
      %3277 = sbr.rel (0) target = $region41
    $region40: #{tpu_custom_call.1} parent=1 // pred_region
      %s3279 = ssub.s32 896, 896
      %3280 = vsyncadd [#allocation4], %s3279
      %s3282 = sshll.u32 [#allocation10], 4
      %s3283 = int_to_ptr.vmem [resolvable:$true] %s3282
      %3285 = dma.vmem_to_hbm [thread:$0]  %s3283, 896, %s5, [#allocation4]
    $region41: #{tpu_custom_call.1} parent=1 // pred_fallthru
      _
    // Predicated region
    $region42: #{tpu_custom_call.1} parent=1 // pred_check
      _
    $region43: #{tpu_custom_call.1} parent=1 // pred_check_branch
      %3287 = sbr.rel (0) target = $region45
    $region44: #{tpu_custom_call.1} parent=1 // pred_region
      %3288 = dma.done [#allocation4], 896
    $region45: #{tpu_custom_call.1} parent=1 // pred_fallthru
      _
    %3289 = vsyncpa [#allocation3], 1
    %3290 = vsyncpa [#allocation6], 1
    %3291 = vsyncpa [#allocation9], 1
    %3292 = vsyncpa [#allocation4], 1

</llo_original>
